<compile_context>
chip_gen: v6e
topology: v6e:2x2x1
jax: 0.10.0
libtpu: 0.0.40
codegen_flags: <defaults>
</compile_context>

<pallas_src>
import functools

import jax
import jax.numpy as jnp
import numpy as np
from jax import lax
from jax.experimental import pallas as pl
from jax.experimental.pallas import tpu as pltpu

HIDDEN_SIZE = 4
INPUT_LEN = 12
OUTPUT_SIZE = 1


def _ceil8(n):
    """Round up to a multiple of 8 (sublane-tile alignment for slab sections)."""
    return -(-n // 8) * 8


def _tree_sum(parts):
    """Pairwise (tree) reduction -> shorter dependent-add depth than a linear chain."""
    while len(parts) > 1:
        nxt = []
        for i in range(0, len(parts), 2):
            if i + 1 < len(parts):
                nxt.append(parts[i] + parts[i + 1])
            else:
                nxt.append(parts[i])
        parts = nxt
    return parts[0]


def gru_kernel(slab_ref, out_ref, *, seq_len, batch, input_len, hidden):
    """Whole-sequence GRU recurrence + output Linear, single invocation, single input.

    slab_ref : (R, W) f32 slab, W = max(I, 3H), sections at static 8-aligned rows:
        rows [0, S*B)                     : x, time-major / batch-minor rows (cols 0:I)
        rows [r_wih, r_wih + I)           : W_ih^T  (I, 3H), gate order [r, z, n]
        rows [r_whh, r_whh + H)           : W_hh^T  (H, 3H)
        row   r_bias                      : b_ih with b_hh[r], b_hh[z] folded in (3H)
        row   r_bias + 1                  : [ b_hh[n] (H) | w2 (H) | b2 (1) | pad ]
    out_ref  : (S*B, 1) Linear outputs; wrapper reshapes to (S, B, 1)
    """
    S, B, I, H = seq_len, batch, input_len, hidden
    SB = S * B
    r_wih = _ceil8(SB)
    r_whh = r_wih + _ceil8(I)
    r_bias = r_whh + _ceil8(H)

    slab = slab_ref[...]                         # one load of the whole slab

    x_all = slab[0:SB, 0:I]                      # (S*B, I)
    wih_t = slab[r_wih:r_wih + I, 0:3 * H]       # (I, 3H)
    whh_t = slab[r_whh:r_whh + H, 0:3 * H]       # (H, 3H)
    bgi = slab[r_bias:r_bias + 1, 0:3 * H]       # (1, 3H)  b_hh[r], b_hh[z] folded in
    misc = slab[r_bias + 1:r_bias + 2, :]        # (1, W)
    bhh_n = misc[:, 0:H]                         # (1, H)   stays inside r * (...)
    w2 = misc[:, H:2 * H]                        # (1, H)
    b2 = misc[:, 2 * H:2 * H + 1]                # (1, 1)

    # ---- Off the serial chain: input->gates for ALL time steps, one MXU matmul. ----
    # HIGHEST precision keeps the exact-f32 behavior (default would be single-pass bf16).
    gi_all = jnp.dot(x_all, wih_t,
                     precision=lax.Precision.HIGHEST,
                     preferred_element_type=jnp.float32) + bgi          # (S*B, 3H)

    # Hoist the loop-invariant W_hh^T rows out of the unrolled recurrence.
    w_rows = [whh_t[k:k + 1, :] for k in range(H)]                      # H x (1, 3H)

    # ---- Recurrence, fully unrolled over the static sequence length. ----
    h = jnp.zeros((B, H), jnp.float32)           # h_0 = 0 (PyTorch default)
    outs = []
    for t in range(S):
        lo = t * B
        gi_t = gi_all[lo:lo + B, :]              # (B, 3H), static slice

        # Recurrent h->gates product on the VPU; tree-summed partials (depth-2 adds).
        gh = _tree_sum([h[:, k:k + 1] * w_rows[k] for k in range(H)])   # (B, 3H)

        # Fused r/z: one sigmoid (single EUP push) over the concatenated pre-activations.
        rz = jax.nn.sigmoid(gi_t[:, 0:2 * H] + gh[:, 0:2 * H])          # (B, 2H)
        r = rz[:, 0:H]
        z = rz[:, H:2 * H]
        n = jnp.tanh(gi_t[:, 2 * H:3 * H] + r * (gh[:, 2 * H:3 * H] + bhh_n))
        h = (1.0 - z) * n + z * h                # (B, H)

        outs.append(h)                           # stays live in vregs (no VMEM stash)

    # ---- Epilogue, off the serial chain: output Linear over all hidden states. ----
    hs = jnp.concatenate(outs, axis=0)           # (S*B, H)
    out = _tree_sum([hs[:, k:k + 1] * w2[:, k:k + 1] for k in range(H)])
    out_ref[...] = out + b2                      # single (S*B, 1) store


def _gru_forward_impl(x, w_ih, w_hh, b_ih, b_hh, w2, b2):
    """x: (S, B, I); parameters in native PyTorch nn.GRU / nn.Linear layouts."""
    S, B, I = x.shape
    H = w_hh.shape[1]
    SB = S * B
    W = max(I, 3 * H)

    # Free layout plumbing in plain XLA (outside the kernel): build the single slab.
    x_flat = x.reshape(SB, I).astype(jnp.float32)
    wih_t = w_ih.T.astype(jnp.float32)                                  # (I, 3H)
    whh_t = w_hh.T.astype(jnp.float32)                                  # (H, 3H)
    # Fold the r/z components of b_hh into the precomputed input-gate bias.
    b_gi = b_ih + jnp.concatenate([b_hh[:2 * H], jnp.zeros((H,), b_hh.dtype)])
    misc = jnp.concatenate([b_hh[2 * H:], w2.reshape(-1), b2.reshape(-1)])  # (2H+1,)

    def block(a, rows):
        return jnp.pad(a, ((0, rows - a.shape[0]), (0, W - a.shape[1])))

    bias_block = jnp.zeros((8, W), jnp.float32)
    bias_block = bias_block.at[0, :3 * H].set(b_gi.astype(jnp.float32))
    bias_block = bias_block.at[1, :2 * H + 1].set(misc.astype(jnp.float32))

    slab = jnp.concatenate([
        block(x_flat, _ceil8(SB)),
        block(wih_t, _ceil8(I)),
        block(whh_t, _ceil8(H)),
        bias_block,
    ], axis=0)                                                          # (48, 12) here

    kernel = functools.partial(gru_kernel, seq_len=S, batch=B, input_len=I, hidden=H)
    out_flat = pl.pallas_call(
        kernel,
        out_shape=jax.ShapeDtypeStruct((SB, OUTPUT_SIZE), jnp.float32),
        # Single invocation (no grid): one input array, one DMA, everything VMEM-resident.
        in_specs=[pl.BlockSpec(memory_space=pltpu.MemorySpace.VMEM)],
        out_specs=pl.BlockSpec(memory_space=pltpu.MemorySpace.VMEM),
    )(slab)

    # Same as the module's x.view(s, b, -1).
    return out_flat.reshape(S, B, OUTPUT_SIZE)


gru_forward = jax.jit(_gru_forward_impl)


def gru_reference(x, w_ih, w_hh, b_ih, b_hh, w2, b2):
    """Pure-JAX reference with PyTorch GRU semantics (gate order r, z, n), exact f32."""
    S, B, I = x.shape
    H = w_hh.shape[1]
    hp = lax.Precision.HIGHEST

    def step(h_prev, x_t):
        gi = jnp.dot(x_t, w_ih.T, precision=hp) + b_ih
        gh = jnp.dot(h_prev, w_hh.T, precision=hp) + b_hh
        r = jax.nn.sigmoid(gi[:, :H] + gh[:, :H])
        z = jax.nn.sigmoid(gi[:, H:2 * H] + gh[:, H:2 * H])
        n = jnp.tanh(gi[:, 2 * H:] + r * gh[:, 2 * H:])
        h = (1.0 - z) * n + z * h_prev
        return h, h

    h0 = jnp.zeros((B, H), jnp.float32)
    _, hs = lax.scan(step, h0, x)                                  # (S, B, H)
    out = jnp.dot(hs.reshape(S * B, H), w2.T, precision=hp) + b2   # (S*B, 1)
    return out.reshape(S, B, OUTPUT_SIZE)


if __name__ == "__main__":
    key = jax.random.PRNGKey(0)
    k_x, k1, k2, k3, k4, k5, k6 = jax.random.split(key, 7)

    S, B, I, H = 8, 2, INPUT_LEN, HIDDEN_SIZE
    stdv = 1.0 / np.sqrt(H)

    # Deterministic synthetic parameters (PyTorch-style uniform(-1/sqrt(H), 1/sqrt(H)))
    w_ih = jax.random.uniform(k1, (3 * H, I), jnp.float32, -stdv, stdv)  # gate order [r, z, n]
    w_hh = jax.random.uniform(k2, (3 * H, H), jnp.float32, -stdv, stdv)
    b_ih = jax.random.uniform(k3, (3 * H,), jnp.float32, -stdv, stdv)
    b_hh = jax.random.uniform(k4, (3 * H,), jnp.float32, -stdv, stdv)
    w2 = jax.random.uniform(k5, (OUTPUT_SIZE, H), jnp.float32, -stdv, stdv)
    b2 = jax.random.uniform(k6, (OUTPUT_SIZE,), jnp.float32, -stdv, stdv)

    x = jax.random.normal(k_x, (S, B, I), jnp.float32)

    out = gru_forward(x, w_ih, w_hh, b_ih, b_hh, w2, b2)
    out = jax.block_until_ready(out)

    ref = gru_reference(x, w_ih, w_hh, b_ih, b_hh, w2, b2)
    np.testing.assert_allclose(np.asarray(out), np.asarray(ref), rtol=1e-5, atol=1e-5)

    # NOTE: self.dropout is never applied in the PyTorch forward(), so none here either.
    print("KERNEL_OK")
</pallas_src>

<mosaic_0001>
module attributes {stable_mosaic.version = 11 : i64} {
  func.func @gru_kernel(%arg0: memref<48x12xf32, #tpu.memory_space<vmem>>, %arg1: memref<16x1xf32, #tpu.memory_space<vmem>>) attributes {dimension_semantics = [], scalar_prefetch = 0 : i64, scratch_operands = 0 : i64, tpu.core_type = #tpu.core_type<tc>} {
    %c0 = arith.constant 0 : index
    %c0_0 = arith.constant 0 : index
    %0 = vector.load %arg0[%c0, %c0_0] : memref<48x12xf32, #tpu.memory_space<vmem>>, vector<48x12xf32>
    %1 = vector.extract_strided_slice %0 {offsets = [0, 0], sizes = [16, 12], strides = [1, 1]} : vector<48x12xf32> to vector<16x12xf32>
    %2 = vector.extract_strided_slice %0 {offsets = [16, 0], sizes = [12, 12], strides = [1, 1]} : vector<48x12xf32> to vector<12x12xf32>
    %3 = vector.extract_strided_slice %0 {offsets = [32, 0], sizes = [4, 12], strides = [1, 1]} : vector<48x12xf32> to vector<4x12xf32>
    %4 = vector.extract_strided_slice %0 {offsets = [40, 0], sizes = [1, 12], strides = [1, 1]} : vector<48x12xf32> to vector<1x12xf32>
    %5 = vector.extract_strided_slice %0 {offsets = [41, 0], sizes = [1, 12], strides = [1, 1]} : vector<48x12xf32> to vector<1x12xf32>
    %6 = vector.extract_strided_slice %5 {offsets = [0, 0], sizes = [1, 4], strides = [1, 1]} : vector<1x12xf32> to vector<1x4xf32>
    %7 = vector.extract_strided_slice %5 {offsets = [0, 4], sizes = [1, 4], strides = [1, 1]} : vector<1x12xf32> to vector<1x4xf32>
    %8 = vector.extract_strided_slice %5 {offsets = [0, 8], sizes = [1, 1], strides = [1, 1]} : vector<1x12xf32> to vector<1x1xf32>
    %cst = arith.constant dense<0.000000e+00> : vector<16x12xf32>
    %9 = tpu.matmul %1, %2, %cst {dimension_numbers = #tpu.dot_dimension_numbers<[1], [0], [0], [1], [0, 0, 1, 1], [], []>, precision = #tpu.contract_precision<fp32>} : vector<16x12xf32>, vector<12x12xf32>, vector<16x12xf32> -> vector<16x12xf32>
    %10 = vector.broadcast %4 : vector<1x12xf32> to vector<16x12xf32>
    %11 = arith.addf %9, %10 : vector<16x12xf32>
    %12 = vector.extract_strided_slice %3 {offsets = [0, 0], sizes = [1, 12], strides = [1, 1]} : vector<4x12xf32> to vector<1x12xf32>
    %13 = vector.extract_strided_slice %3 {offsets = [1, 0], sizes = [1, 12], strides = [1, 1]} : vector<4x12xf32> to vector<1x12xf32>
    %14 = vector.extract_strided_slice %3 {offsets = [2, 0], sizes = [1, 12], strides = [1, 1]} : vector<4x12xf32> to vector<1x12xf32>
    %15 = vector.extract_strided_slice %3 {offsets = [3, 0], sizes = [1, 12], strides = [1, 1]} : vector<4x12xf32> to vector<1x12xf32>
    %cst_1 = arith.constant 0.000000e+00 : f32
    %16 = vector.broadcast %cst_1 : f32 to vector<2x4xf32>
    %17 = vector.extract_strided_slice %11 {offsets = [0, 0], sizes = [2, 12], strides = [1, 1]} : vector<16x12xf32> to vector<2x12xf32>
    %18 = vector.extract_strided_slice %16 {offsets = [0, 0], sizes = [2, 1], strides = [1, 1]} : vector<2x4xf32> to vector<2x1xf32>
    %19 = vector.broadcast %18 : vector<2x1xf32> to vector<2x12xf32>
    %20 = vector.broadcast %12 : vector<1x12xf32> to vector<2x12xf32>
    %21 = arith.mulf %19, %20 : vector<2x12xf32>
    %22 = vector.extract_strided_slice %16 {offsets = [0, 1], sizes = [2, 1], strides = [1, 1]} : vector<2x4xf32> to vector<2x1xf32>
    %23 = vector.broadcast %22 : vector<2x1xf32> to vector<2x12xf32>
    %24 = vector.broadcast %13 : vector<1x12xf32> to vector<2x12xf32>
    %25 = arith.mulf %23, %24 : vector<2x12xf32>
    %26 = vector.extract_strided_slice %16 {offsets = [0, 2], sizes = [2, 1], strides = [1, 1]} : vector<2x4xf32> to vector<2x1xf32>
    %27 = vector.broadcast %26 : vector<2x1xf32> to vector<2x12xf32>
    %28 = vector.broadcast %14 : vector<1x12xf32> to vector<2x12xf32>
    %29 = arith.mulf %27, %28 : vector<2x12xf32>
    %30 = vector.extract_strided_slice %16 {offsets = [0, 3], sizes = [2, 1], strides = [1, 1]} : vector<2x4xf32> to vector<2x1xf32>
    %31 = vector.broadcast %30 : vector<2x1xf32> to vector<2x12xf32>
    %32 = vector.broadcast %15 : vector<1x12xf32> to vector<2x12xf32>
    %33 = arith.mulf %31, %32 : vector<2x12xf32>
    %34 = arith.addf %21, %25 : vector<2x12xf32>
    %35 = arith.addf %29, %33 : vector<2x12xf32>
    %36 = arith.addf %34, %35 : vector<2x12xf32>
    %37 = vector.extract_strided_slice %17 {offsets = [0, 0], sizes = [2, 8], strides = [1, 1]} : vector<2x12xf32> to vector<2x8xf32>
    %38 = vector.extract_strided_slice %36 {offsets = [0, 0], sizes = [2, 8], strides = [1, 1]} : vector<2x12xf32> to vector<2x8xf32>
    %39 = arith.addf %37, %38 : vector<2x8xf32>
    %40 = arith.negf %39 : vector<2x8xf32>
    %41 = math.exp %40 : vector<2x8xf32>
    %cst_2 = arith.constant 1.000000e+00 : f32
    %42 = vector.broadcast %cst_2 : f32 to vector<2x8xf32>
    %43 = arith.addf %42, %41 : vector<2x8xf32>
    %44 = arith.divf %42, %43 : vector<2x8xf32>
    %45 = vector.extract_strided_slice %44 {offsets = [0, 0], sizes = [2, 4], strides = [1, 1]} : vector<2x8xf32> to vector<2x4xf32>
    %46 = vector.extract_strided_slice %44 {offsets = [0, 4], sizes = [2, 4], strides = [1, 1]} : vector<2x8xf32> to vector<2x4xf32>
    %47 = vector.extract_strided_slice %17 {offsets = [0, 8], sizes = [2, 4], strides = [1, 1]} : vector<2x12xf32> to vector<2x4xf32>
    %48 = vector.extract_strided_slice %36 {offsets = [0, 8], sizes = [2, 4], strides = [1, 1]} : vector<2x12xf32> to vector<2x4xf32>
    %49 = vector.broadcast %6 : vector<1x4xf32> to vector<2x4xf32>
    %50 = arith.addf %48, %49 : vector<2x4xf32>
    %51 = arith.mulf %45, %50 : vector<2x4xf32>
    %52 = arith.addf %47, %51 : vector<2x4xf32>
    %53 = math.tanh %52 : vector<2x4xf32>
    %cst_3 = arith.constant 1.000000e+00 : f32
    %54 = vector.broadcast %cst_3 : f32 to vector<2x4xf32>
    %55 = arith.subf %54, %46 : vector<2x4xf32>
    %56 = arith.mulf %55, %53 : vector<2x4xf32>
    %57 = arith.mulf %46, %16 : vector<2x4xf32>
    %58 = arith.addf %56, %57 : vector<2x4xf32>
    %59 = vector.extract_strided_slice %11 {offsets = [2, 0], sizes = [2, 12], strides = [1, 1]} : vector<16x12xf32> to vector<2x12xf32>
    %60 = vector.extract_strided_slice %58 {offsets = [0, 0], sizes = [2, 1], strides = [1, 1]} : vector<2x4xf32> to vector<2x1xf32>
    %61 = vector.broadcast %60 : vector<2x1xf32> to vector<2x12xf32>
    %62 = vector.broadcast %12 : vector<1x12xf32> to vector<2x12xf32>
    %63 = arith.mulf %61, %62 : vector<2x12xf32>
    %64 = vector.extract_strided_slice %58 {offsets = [0, 1], sizes = [2, 1], strides = [1, 1]} : vector<2x4xf32> to vector<2x1xf32>
    %65 = vector.broadcast %64 : vector<2x1xf32> to vector<2x12xf32>
    %66 = vector.broadcast %13 : vector<1x12xf32> to vector<2x12xf32>
    %67 = arith.mulf %65, %66 : vector<2x12xf32>
    %68 = vector.extract_strided_slice %58 {offsets = [0, 2], sizes = [2, 1], strides = [1, 1]} : vector<2x4xf32> to vector<2x1xf32>
    %69 = vector.broadcast %68 : vector<2x1xf32> to vector<2x12xf32>
    %70 = vector.broadcast %14 : vector<1x12xf32> to vector<2x12xf32>
    %71 = arith.mulf %69, %70 : vector<2x12xf32>
    %72 = vector.extract_strided_slice %58 {offsets = [0, 3], sizes = [2, 1], strides = [1, 1]} : vector<2x4xf32> to vector<2x1xf32>
    %73 = vector.broadcast %72 : vector<2x1xf32> to vector<2x12xf32>
    %74 = vector.broadcast %15 : vector<1x12xf32> to vector<2x12xf32>
    %75 = arith.mulf %73, %74 : vector<2x12xf32>
    %76 = arith.addf %63, %67 : vector<2x12xf32>
    %77 = arith.addf %71, %75 : vector<2x12xf32>
    %78 = arith.addf %76, %77 : vector<2x12xf32>
    %79 = vector.extract_strided_slice %59 {offsets = [0, 0], sizes = [2, 8], strides = [1, 1]} : vector<2x12xf32> to vector<2x8xf32>
    %80 = vector.extract_strided_slice %78 {offsets = [0, 0], sizes = [2, 8], strides = [1, 1]} : vector<2x12xf32> to vector<2x8xf32>
    %81 = arith.addf %79, %80 : vector<2x8xf32>
    %82 = arith.negf %81 : vector<2x8xf32>
    %83 = math.exp %82 : vector<2x8xf32>
    %cst_4 = arith.constant 1.000000e+00 : f32
    %84 = vector.broadcast %cst_4 : f32 to vector<2x8xf32>
    %85 = arith.addf %84, %83 : vector<2x8xf32>
    %86 = arith.divf %84, %85 : vector<2x8xf32>
    %87 = vector.extract_strided_slice %86 {offsets = [0, 0], sizes = [2, 4], strides = [1, 1]} : vector<2x8xf32> to vector<2x4xf32>
    %88 = vector.extract_strided_slice %86 {offsets = [0, 4], sizes = [2, 4], strides = [1, 1]} : vector<2x8xf32> to vector<2x4xf32>
    %89 = vector.extract_strided_slice %59 {offsets = [0, 8], sizes = [2, 4], strides = [1, 1]} : vector<2x12xf32> to vector<2x4xf32>
    %90 = vector.extract_strided_slice %78 {offsets = [0, 8], sizes = [2, 4], strides = [1, 1]} : vector<2x12xf32> to vector<2x4xf32>
    %91 = vector.broadcast %6 : vector<1x4xf32> to vector<2x4xf32>
    %92 = arith.addf %90, %91 : vector<2x4xf32>
    %93 = arith.mulf %87, %92 : vector<2x4xf32>
    %94 = arith.addf %89, %93 : vector<2x4xf32>
    %95 = math.tanh %94 : vector<2x4xf32>
    %cst_5 = arith.constant 1.000000e+00 : f32
    %96 = vector.broadcast %cst_5 : f32 to vector<2x4xf32>
    %97 = arith.subf %96, %88 : vector<2x4xf32>
    %98 = arith.mulf %97, %95 : vector<2x4xf32>
    %99 = arith.mulf %88, %58 : vector<2x4xf32>
    %100 = arith.addf %98, %99 : vector<2x4xf32>
    %101 = vector.extract_strided_slice %11 {offsets = [4, 0], sizes = [2, 12], strides = [1, 1]} : vector<16x12xf32> to vector<2x12xf32>
    %102 = vector.extract_strided_slice %100 {offsets = [0, 0], sizes = [2, 1], strides = [1, 1]} : vector<2x4xf32> to vector<2x1xf32>
    %103 = vector.broadcast %102 : vector<2x1xf32> to vector<2x12xf32>
    %104 = vector.broadcast %12 : vector<1x12xf32> to vector<2x12xf32>
    %105 = arith.mulf %103, %104 : vector<2x12xf32>
    %106 = vector.extract_strided_slice %100 {offsets = [0, 1], sizes = [2, 1], strides = [1, 1]} : vector<2x4xf32> to vector<2x1xf32>
    %107 = vector.broadcast %106 : vector<2x1xf32> to vector<2x12xf32>
    %108 = vector.broadcast %13 : vector<1x12xf32> to vector<2x12xf32>
    %109 = arith.mulf %107, %108 : vector<2x12xf32>
    %110 = vector.extract_strided_slice %100 {offsets = [0, 2], sizes = [2, 1], strides = [1, 1]} : vector<2x4xf32> to vector<2x1xf32>
    %111 = vector.broadcast %110 : vector<2x1xf32> to vector<2x12xf32>
    %112 = vector.broadcast %14 : vector<1x12xf32> to vector<2x12xf32>
    %113 = arith.mulf %111, %112 : vector<2x12xf32>
    %114 = vector.extract_strided_slice %100 {offsets = [0, 3], sizes = [2, 1], strides = [1, 1]} : vector<2x4xf32> to vector<2x1xf32>
    %115 = vector.broadcast %114 : vector<2x1xf32> to vector<2x12xf32>
    %116 = vector.broadcast %15 : vector<1x12xf32> to vector<2x12xf32>
    %117 = arith.mulf %115, %116 : vector<2x12xf32>
    %118 = arith.addf %105, %109 : vector<2x12xf32>
    %119 = arith.addf %113, %117 : vector<2x12xf32>
    %120 = arith.addf %118, %119 : vector<2x12xf32>
    %121 = vector.extract_strided_slice %101 {offsets = [0, 0], sizes = [2, 8], strides = [1, 1]} : vector<2x12xf32> to vector<2x8xf32>
    %122 = vector.extract_strided_slice %120 {offsets = [0, 0], sizes = [2, 8], strides = [1, 1]} : vector<2x12xf32> to vector<2x8xf32>
    %123 = arith.addf %121, %122 : vector<2x8xf32>
    %124 = arith.negf %123 : vector<2x8xf32>
    %125 = math.exp %124 : vector<2x8xf32>
    %cst_6 = arith.constant 1.000000e+00 : f32
    %126 = vector.broadcast %cst_6 : f32 to vector<2x8xf32>
    %127 = arith.addf %126, %125 : vector<2x8xf32>
    %128 = arith.divf %126, %127 : vector<2x8xf32>
    %129 = vector.extract_strided_slice %128 {offsets = [0, 0], sizes = [2, 4], strides = [1, 1]} : vector<2x8xf32> to vector<2x4xf32>
    %130 = vector.extract_strided_slice %128 {offsets = [0, 4], sizes = [2, 4], strides = [1, 1]} : vector<2x8xf32> to vector<2x4xf32>
    %131 = vector.extract_strided_slice %101 {offsets = [0, 8], sizes = [2, 4], strides = [1, 1]} : vector<2x12xf32> to vector<2x4xf32>
    %132 = vector.extract_strided_slice %120 {offsets = [0, 8], sizes = [2, 4], strides = [1, 1]} : vector<2x12xf32> to vector<2x4xf32>
    %133 = vector.broadcast %6 : vector<1x4xf32> to vector<2x4xf32>
    %134 = arith.addf %132, %133 : vector<2x4xf32>
    %135 = arith.mulf %129, %134 : vector<2x4xf32>
    %136 = arith.addf %131, %135 : vector<2x4xf32>
    %137 = math.tanh %136 : vector<2x4xf32>
    %cst_7 = arith.constant 1.000000e+00 : f32
    %138 = vector.broadcast %cst_7 : f32 to vector<2x4xf32>
    %139 = arith.subf %138, %130 : vector<2x4xf32>
    %140 = arith.mulf %139, %137 : vector<2x4xf32>
    %141 = arith.mulf %130, %100 : vector<2x4xf32>
    %142 = arith.addf %140, %141 : vector<2x4xf32>
    %143 = vector.extract_strided_slice %11 {offsets = [6, 0], sizes = [2, 12], strides = [1, 1]} : vector<16x12xf32> to vector<2x12xf32>
    %144 = vector.extract_strided_slice %142 {offsets = [0, 0], sizes = [2, 1], strides = [1, 1]} : vector<2x4xf32> to vector<2x1xf32>
    %145 = vector.broadcast %144 : vector<2x1xf32> to vector<2x12xf32>
    %146 = vector.broadcast %12 : vector<1x12xf32> to vector<2x12xf32>
    %147 = arith.mulf %145, %146 : vector<2x12xf32>
    %148 = vector.extract_strided_slice %142 {offsets = [0, 1], sizes = [2, 1], strides = [1, 1]} : vector<2x4xf32> to vector<2x1xf32>
    %149 = vector.broadcast %148 : vector<2x1xf32> to vector<2x12xf32>
    %150 = vector.broadcast %13 : vector<1x12xf32> to vector<2x12xf32>
    %151 = arith.mulf %149, %150 : vector<2x12xf32>
    %152 = vector.extract_strided_slice %142 {offsets = [0, 2], sizes = [2, 1], strides = [1, 1]} : vector<2x4xf32> to vector<2x1xf32>
    %153 = vector.broadcast %152 : vector<2x1xf32> to vector<2x12xf32>
    %154 = vector.broadcast %14 : vector<1x12xf32> to vector<2x12xf32>
    %155 = arith.mulf %153, %154 : vector<2x12xf32>
    %156 = vector.extract_strided_slice %142 {offsets = [0, 3], sizes = [2, 1], strides = [1, 1]} : vector<2x4xf32> to vector<2x1xf32>
    %157 = vector.broadcast %156 : vector<2x1xf32> to vector<2x12xf32>
    %158 = vector.broadcast %15 : vector<1x12xf32> to vector<2x12xf32>
    %159 = arith.mulf %157, %158 : vector<2x12xf32>
    %160 = arith.addf %147, %151 : vector<2x12xf32>
    %161 = arith.addf %155, %159 : vector<2x12xf32>
    %162 = arith.addf %160, %161 : vector<2x12xf32>
    %163 = vector.extract_strided_slice %143 {offsets = [0, 0], sizes = [2, 8], strides = [1, 1]} : vector<2x12xf32> to vector<2x8xf32>
    %164 = vector.extract_strided_slice %162 {offsets = [0, 0], sizes = [2, 8], strides = [1, 1]} : vector<2x12xf32> to vector<2x8xf32>
    %165 = arith.addf %163, %164 : vector<2x8xf32>
    %166 = arith.negf %165 : vector<2x8xf32>
    %167 = math.exp %166 : vector<2x8xf32>
    %cst_8 = arith.constant 1.000000e+00 : f32
    %168 = vector.broadcast %cst_8 : f32 to vector<2x8xf32>
    %169 = arith.addf %168, %167 : vector<2x8xf32>
    %170 = arith.divf %168, %169 : vector<2x8xf32>
    %171 = vector.extract_strided_slice %170 {offsets = [0, 0], sizes = [2, 4], strides = [1, 1]} : vector<2x8xf32> to vector<2x4xf32>
    %172 = vector.extract_strided_slice %170 {offsets = [0, 4], sizes = [2, 4], strides = [1, 1]} : vector<2x8xf32> to vector<2x4xf32>
    %173 = vector.extract_strided_slice %143 {offsets = [0, 8], sizes = [2, 4], strides = [1, 1]} : vector<2x12xf32> to vector<2x4xf32>
    %174 = vector.extract_strided_slice %162 {offsets = [0, 8], sizes = [2, 4], strides = [1, 1]} : vector<2x12xf32> to vector<2x4xf32>
    %175 = vector.broadcast %6 : vector<1x4xf32> to vector<2x4xf32>
    %176 = arith.addf %174, %175 : vector<2x4xf32>
    %177 = arith.mulf %171, %176 : vector<2x4xf32>
    %178 = arith.addf %173, %177 : vector<2x4xf32>
    %179 = math.tanh %178 : vector<2x4xf32>
    %cst_9 = arith.constant 1.000000e+00 : f32
    %180 = vector.broadcast %cst_9 : f32 to vector<2x4xf32>
    %181 = arith.subf %180, %172 : vector<2x4xf32>
    %182 = arith.mulf %181, %179 : vector<2x4xf32>
    %183 = arith.mulf %172, %142 : vector<2x4xf32>
    %184 = arith.addf %182, %183 : vector<2x4xf32>
    %185 = vector.extract_strided_slice %11 {offsets = [8, 0], sizes = [2, 12], strides = [1, 1]} : vector<16x12xf32> to vector<2x12xf32>
    %186 = vector.extract_strided_slice %184 {offsets = [0, 0], sizes = [2, 1], strides = [1, 1]} : vector<2x4xf32> to vector<2x1xf32>
    %187 = vector.broadcast %186 : vector<2x1xf32> to vector<2x12xf32>
    %188 = vector.broadcast %12 : vector<1x12xf32> to vector<2x12xf32>
    %189 = arith.mulf %187, %188 : vector<2x12xf32>
    %190 = vector.extract_strided_slice %184 {offsets = [0, 1], sizes = [2, 1], strides = [1, 1]} : vector<2x4xf32> to vector<2x1xf32>
    %191 = vector.broadcast %190 : vector<2x1xf32> to vector<2x12xf32>
    %192 = vector.broadcast %13 : vector<1x12xf32> to vector<2x12xf32>
    %193 = arith.mulf %191, %192 : vector<2x12xf32>
    %194 = vector.extract_strided_slice %184 {offsets = [0, 2], sizes = [2, 1], strides = [1, 1]} : vector<2x4xf32> to vector<2x1xf32>
    %195 = vector.broadcast %194 : vector<2x1xf32> to vector<2x12xf32>
    %196 = vector.broadcast %14 : vector<1x12xf32> to vector<2x12xf32>
    %197 = arith.mulf %195, %196 : vector<2x12xf32>
    %198 = vector.extract_strided_slice %184 {offsets = [0, 3], sizes = [2, 1], strides = [1, 1]} : vector<2x4xf32> to vector<2x1xf32>
    %199 = vector.broadcast %198 : vector<2x1xf32> to vector<2x12xf32>
    %200 = vector.broadcast %15 : vector<1x12xf32> to vector<2x12xf32>
    %201 = arith.mulf %199, %200 : vector<2x12xf32>
    %202 = arith.addf %189, %193 : vector<2x12xf32>
    %203 = arith.addf %197, %201 : vector<2x12xf32>
    %204 = arith.addf %202, %203 : vector<2x12xf32>
    %205 = vector.extract_strided_slice %185 {offsets = [0, 0], sizes = [2, 8], strides = [1, 1]} : vector<2x12xf32> to vector<2x8xf32>
    %206 = vector.extract_strided_slice %204 {offsets = [0, 0], sizes = [2, 8], strides = [1, 1]} : vector<2x12xf32> to vector<2x8xf32>
    %207 = arith.addf %205, %206 : vector<2x8xf32>
    %208 = arith.negf %207 : vector<2x8xf32>
    %209 = math.exp %208 : vector<2x8xf32>
    %cst_10 = arith.constant 1.000000e+00 : f32
    %210 = vector.broadcast %cst_10 : f32 to vector<2x8xf32>
    %211 = arith.addf %210, %209 : vector<2x8xf32>
    %212 = arith.divf %210, %211 : vector<2x8xf32>
    %213 = vector.extract_strided_slice %212 {offsets = [0, 0], sizes = [2, 4], strides = [1, 1]} : vector<2x8xf32> to vector<2x4xf32>
    %214 = vector.extract_strided_slice %212 {offsets = [0, 4], sizes = [2, 4], strides = [1, 1]} : vector<2x8xf32> to vector<2x4xf32>
    %215 = vector.extract_strided_slice %185 {offsets = [0, 8], sizes = [2, 4], strides = [1, 1]} : vector<2x12xf32> to vector<2x4xf32>
    %216 = vector.extract_strided_slice %204 {offsets = [0, 8], sizes = [2, 4], strides = [1, 1]} : vector<2x12xf32> to vector<2x4xf32>
    %217 = vector.broadcast %6 : vector<1x4xf32> to vector<2x4xf32>
    %218 = arith.addf %216, %217 : vector<2x4xf32>
    %219 = arith.mulf %213, %218 : vector<2x4xf32>
    %220 = arith.addf %215, %219 : vector<2x4xf32>
    %221 = math.tanh %220 : vector<2x4xf32>
    %cst_11 = arith.constant 1.000000e+00 : f32
    %222 = vector.broadcast %cst_11 : f32 to vector<2x4xf32>
    %223 = arith.subf %222, %214 : vector<2x4xf32>
    %224 = arith.mulf %223, %221 : vector<2x4xf32>
    %225 = arith.mulf %214, %184 : vector<2x4xf32>
    %226 = arith.addf %224, %225 : vector<2x4xf32>
    %227 = vector.extract_strided_slice %11 {offsets = [10, 0], sizes = [2, 12], strides = [1, 1]} : vector<16x12xf32> to vector<2x12xf32>
    %228 = vector.extract_strided_slice %226 {offsets = [0, 0], sizes = [2, 1], strides = [1, 1]} : vector<2x4xf32> to vector<2x1xf32>
    %229 = vector.broadcast %228 : vector<2x1xf32> to vector<2x12xf32>
    %230 = vector.broadcast %12 : vector<1x12xf32> to vector<2x12xf32>
    %231 = arith.mulf %229, %230 : vector<2x12xf32>
    %232 = vector.extract_strided_slice %226 {offsets = [0, 1], sizes = [2, 1], strides = [1, 1]} : vector<2x4xf32> to vector<2x1xf32>
    %233 = vector.broadcast %232 : vector<2x1xf32> to vector<2x12xf32>
    %234 = vector.broadcast %13 : vector<1x12xf32> to vector<2x12xf32>
    %235 = arith.mulf %233, %234 : vector<2x12xf32>
    %236 = vector.extract_strided_slice %226 {offsets = [0, 2], sizes = [2, 1], strides = [1, 1]} : vector<2x4xf32> to vector<2x1xf32>
    %237 = vector.broadcast %236 : vector<2x1xf32> to vector<2x12xf32>
    %238 = vector.broadcast %14 : vector<1x12xf32> to vector<2x12xf32>
    %239 = arith.mulf %237, %238 : vector<2x12xf32>
    %240 = vector.extract_strided_slice %226 {offsets = [0, 3], sizes = [2, 1], strides = [1, 1]} : vector<2x4xf32> to vector<2x1xf32>
    %241 = vector.broadcast %240 : vector<2x1xf32> to vector<2x12xf32>
    %242 = vector.broadcast %15 : vector<1x12xf32> to vector<2x12xf32>
    %243 = arith.mulf %241, %242 : vector<2x12xf32>
    %244 = arith.addf %231, %235 : vector<2x12xf32>
    %245 = arith.addf %239, %243 : vector<2x12xf32>
    %246 = arith.addf %244, %245 : vector<2x12xf32>
    %247 = vector.extract_strided_slice %227 {offsets = [0, 0], sizes = [2, 8], strides = [1, 1]} : vector<2x12xf32> to vector<2x8xf32>
    %248 = vector.extract_strided_slice %246 {offsets = [0, 0], sizes = [2, 8], strides = [1, 1]} : vector<2x12xf32> to vector<2x8xf32>
    %249 = arith.addf %247, %248 : vector<2x8xf32>
    %250 = arith.negf %249 : vector<2x8xf32>
    %251 = math.exp %250 : vector<2x8xf32>
    %cst_12 = arith.constant 1.000000e+00 : f32
    %252 = vector.broadcast %cst_12 : f32 to vector<2x8xf32>
    %253 = arith.addf %252, %251 : vector<2x8xf32>
    %254 = arith.divf %252, %253 : vector<2x8xf32>
    %255 = vector.extract_strided_slice %254 {offsets = [0, 0], sizes = [2, 4], strides = [1, 1]} : vector<2x8xf32> to vector<2x4xf32>
    %256 = vector.extract_strided_slice %254 {offsets = [0, 4], sizes = [2, 4], strides = [1, 1]} : vector<2x8xf32> to vector<2x4xf32>
    %257 = vector.extract_strided_slice %227 {offsets = [0, 8], sizes = [2, 4], strides = [1, 1]} : vector<2x12xf32> to vector<2x4xf32>
    %258 = vector.extract_strided_slice %246 {offsets = [0, 8], sizes = [2, 4], strides = [1, 1]} : vector<2x12xf32> to vector<2x4xf32>
    %259 = vector.broadcast %6 : vector<1x4xf32> to vector<2x4xf32>
    %260 = arith.addf %258, %259 : vector<2x4xf32>
    %261 = arith.mulf %255, %260 : vector<2x4xf32>
    %262 = arith.addf %257, %261 : vector<2x4xf32>
    %263 = math.tanh %262 : vector<2x4xf32>
    %cst_13 = arith.constant 1.000000e+00 : f32
    %264 = vector.broadcast %cst_13 : f32 to vector<2x4xf32>
    %265 = arith.subf %264, %256 : vector<2x4xf32>
    %266 = arith.mulf %265, %263 : vector<2x4xf32>
    %267 = arith.mulf %256, %226 : vector<2x4xf32>
    %268 = arith.addf %266, %267 : vector<2x4xf32>
    %269 = vector.extract_strided_slice %11 {offsets = [12, 0], sizes = [2, 12], strides = [1, 1]} : vector<16x12xf32> to vector<2x12xf32>
    %270 = vector.extract_strided_slice %268 {offsets = [0, 0], sizes = [2, 1], strides = [1, 1]} : vector<2x4xf32> to vector<2x1xf32>
    %271 = vector.broadcast %270 : vector<2x1xf32> to vector<2x12xf32>
    %272 = vector.broadcast %12 : vector<1x12xf32> to vector<2x12xf32>
    %273 = arith.mulf %271, %272 : vector<2x12xf32>
    %274 = vector.extract_strided_slice %268 {offsets = [0, 1], sizes = [2, 1], strides = [1, 1]} : vector<2x4xf32> to vector<2x1xf32>
    %275 = vector.broadcast %274 : vector<2x1xf32> to vector<2x12xf32>
    %276 = vector.broadcast %13 : vector<1x12xf32> to vector<2x12xf32>
    %277 = arith.mulf %275, %276 : vector<2x12xf32>
    %278 = vector.extract_strided_slice %268 {offsets = [0, 2], sizes = [2, 1], strides = [1, 1]} : vector<2x4xf32> to vector<2x1xf32>
    %279 = vector.broadcast %278 : vector<2x1xf32> to vector<2x12xf32>
    %280 = vector.broadcast %14 : vector<1x12xf32> to vector<2x12xf32>
    %281 = arith.mulf %279, %280 : vector<2x12xf32>
    %282 = vector.extract_strided_slice %268 {offsets = [0, 3], sizes = [2, 1], strides = [1, 1]} : vector<2x4xf32> to vector<2x1xf32>
    %283 = vector.broadcast %282 : vector<2x1xf32> to vector<2x12xf32>
    %284 = vector.broadcast %15 : vector<1x12xf32> to vector<2x12xf32>
    %285 = arith.mulf %283, %284 : vector<2x12xf32>
    %286 = arith.addf %273, %277 : vector<2x12xf32>
    %287 = arith.addf %281, %285 : vector<2x12xf32>
    %288 = arith.addf %286, %287 : vector<2x12xf32>
    %289 = vector.extract_strided_slice %269 {offsets = [0, 0], sizes = [2, 8], strides = [1, 1]} : vector<2x12xf32> to vector<2x8xf32>
    %290 = vector.extract_strided_slice %288 {offsets = [0, 0], sizes = [2, 8], strides = [1, 1]} : vector<2x12xf32> to vector<2x8xf32>
    %291 = arith.addf %289, %290 : vector<2x8xf32>
    %292 = arith.negf %291 : vector<2x8xf32>
    %293 = math.exp %292 : vector<2x8xf32>
    %cst_14 = arith.constant 1.000000e+00 : f32
    %294 = vector.broadcast %cst_14 : f32 to vector<2x8xf32>
    %295 = arith.addf %294, %293 : vector<2x8xf32>
    %296 = arith.divf %294, %295 : vector<2x8xf32>
    %297 = vector.extract_strided_slice %296 {offsets = [0, 0], sizes = [2, 4], strides = [1, 1]} : vector<2x8xf32> to vector<2x4xf32>
    %298 = vector.extract_strided_slice %296 {offsets = [0, 4], sizes = [2, 4], strides = [1, 1]} : vector<2x8xf32> to vector<2x4xf32>
    %299 = vector.extract_strided_slice %269 {offsets = [0, 8], sizes = [2, 4], strides = [1, 1]} : vector<2x12xf32> to vector<2x4xf32>
    %300 = vector.extract_strided_slice %288 {offsets = [0, 8], sizes = [2, 4], strides = [1, 1]} : vector<2x12xf32> to vector<2x4xf32>
    %301 = vector.broadcast %6 : vector<1x4xf32> to vector<2x4xf32>
    %302 = arith.addf %300, %301 : vector<2x4xf32>
    %303 = arith.mulf %297, %302 : vector<2x4xf32>
    %304 = arith.addf %299, %303 : vector<2x4xf32>
    %305 = math.tanh %304 : vector<2x4xf32>
    %cst_15 = arith.constant 1.000000e+00 : f32
    %306 = vector.broadcast %cst_15 : f32 to vector<2x4xf32>
    %307 = arith.subf %306, %298 : vector<2x4xf32>
    %308 = arith.mulf %307, %305 : vector<2x4xf32>
    %309 = arith.mulf %298, %268 : vector<2x4xf32>
    %310 = arith.addf %308, %309 : vector<2x4xf32>
    %311 = vector.extract_strided_slice %11 {offsets = [14, 0], sizes = [2, 12], strides = [1, 1]} : vector<16x12xf32> to vector<2x12xf32>
    %312 = vector.extract_strided_slice %310 {offsets = [0, 0], sizes = [2, 1], strides = [1, 1]} : vector<2x4xf32> to vector<2x1xf32>
    %313 = vector.broadcast %312 : vector<2x1xf32> to vector<2x12xf32>
    %314 = vector.broadcast %12 : vector<1x12xf32> to vector<2x12xf32>
    %315 = arith.mulf %313, %314 : vector<2x12xf32>
    %316 = vector.extract_strided_slice %310 {offsets = [0, 1], sizes = [2, 1], strides = [1, 1]} : vector<2x4xf32> to vector<2x1xf32>
    %317 = vector.broadcast %316 : vector<2x1xf32> to vector<2x12xf32>
    %318 = vector.broadcast %13 : vector<1x12xf32> to vector<2x12xf32>
    %319 = arith.mulf %317, %318 : vector<2x12xf32>
    %320 = vector.extract_strided_slice %310 {offsets = [0, 2], sizes = [2, 1], strides = [1, 1]} : vector<2x4xf32> to vector<2x1xf32>
    %321 = vector.broadcast %320 : vector<2x1xf32> to vector<2x12xf32>
    %322 = vector.broadcast %14 : vector<1x12xf32> to vector<2x12xf32>
    %323 = arith.mulf %321, %322 : vector<2x12xf32>
    %324 = vector.extract_strided_slice %310 {offsets = [0, 3], sizes = [2, 1], strides = [1, 1]} : vector<2x4xf32> to vector<2x1xf32>
    %325 = vector.broadcast %324 : vector<2x1xf32> to vector<2x12xf32>
    %326 = vector.broadcast %15 : vector<1x12xf32> to vector<2x12xf32>
    %327 = arith.mulf %325, %326 : vector<2x12xf32>
    %328 = arith.addf %315, %319 : vector<2x12xf32>
    %329 = arith.addf %323, %327 : vector<2x12xf32>
    %330 = arith.addf %328, %329 : vector<2x12xf32>
    %331 = vector.extract_strided_slice %311 {offsets = [0, 0], sizes = [2, 8], strides = [1, 1]} : vector<2x12xf32> to vector<2x8xf32>
    %332 = vector.extract_strided_slice %330 {offsets = [0, 0], sizes = [2, 8], strides = [1, 1]} : vector<2x12xf32> to vector<2x8xf32>
    %333 = arith.addf %331, %332 : vector<2x8xf32>
    %334 = arith.negf %333 : vector<2x8xf32>
    %335 = math.exp %334 : vector<2x8xf32>
    %cst_16 = arith.constant 1.000000e+00 : f32
    %336 = vector.broadcast %cst_16 : f32 to vector<2x8xf32>
    %337 = arith.addf %336, %335 : vector<2x8xf32>
    %338 = arith.divf %336, %337 : vector<2x8xf32>
    %339 = vector.extract_strided_slice %338 {offsets = [0, 0], sizes = [2, 4], strides = [1, 1]} : vector<2x8xf32> to vector<2x4xf32>
    %340 = vector.extract_strided_slice %338 {offsets = [0, 4], sizes = [2, 4], strides = [1, 1]} : vector<2x8xf32> to vector<2x4xf32>
    %341 = vector.extract_strided_slice %311 {offsets = [0, 8], sizes = [2, 4], strides = [1, 1]} : vector<2x12xf32> to vector<2x4xf32>
    %342 = vector.extract_strided_slice %330 {offsets = [0, 8], sizes = [2, 4], strides = [1, 1]} : vector<2x12xf32> to vector<2x4xf32>
    %343 = vector.broadcast %6 : vector<1x4xf32> to vector<2x4xf32>
    %344 = arith.addf %342, %343 : vector<2x4xf32>
    %345 = arith.mulf %339, %344 : vector<2x4xf32>
    %346 = arith.addf %341, %345 : vector<2x4xf32>
    %347 = math.tanh %346 : vector<2x4xf32>
    %cst_17 = arith.constant 1.000000e+00 : f32
    %348 = vector.broadcast %cst_17 : f32 to vector<2x4xf32>
    %349 = arith.subf %348, %340 : vector<2x4xf32>
    %350 = arith.mulf %349, %347 : vector<2x4xf32>
    %351 = arith.mulf %340, %310 : vector<2x4xf32>
    %352 = arith.addf %350, %351 : vector<2x4xf32>
    %353 = tpu.concatenate %58, %100, %142, %184, %226, %268, %310, %352 in 0 : vector<2x4xf32>, vector<2x4xf32>, vector<2x4xf32>, vector<2x4xf32>, vector<2x4xf32>, vector<2x4xf32>, vector<2x4xf32>, vector<2x4xf32> -> vector<16x4xf32>
    %354 = vector.extract_strided_slice %353 {offsets = [0, 0], sizes = [16, 1], strides = [1, 1]} : vector<16x4xf32> to vector<16x1xf32>
    %355 = vector.extract_strided_slice %7 {offsets = [0, 0], sizes = [1, 1], strides = [1, 1]} : vector<1x4xf32> to vector<1x1xf32>
    %356 = vector.broadcast %355 : vector<1x1xf32> to vector<16x1xf32>
    %357 = arith.mulf %354, %356 : vector<16x1xf32>
    %358 = vector.extract_strided_slice %353 {offsets = [0, 1], sizes = [16, 1], strides = [1, 1]} : vector<16x4xf32> to vector<16x1xf32>
    %359 = vector.extract_strided_slice %7 {offsets = [0, 1], sizes = [1, 1], strides = [1, 1]} : vector<1x4xf32> to vector<1x1xf32>
    %360 = vector.broadcast %359 : vector<1x1xf32> to vector<16x1xf32>
    %361 = arith.mulf %358, %360 : vector<16x1xf32>
    %362 = vector.extract_strided_slice %353 {offsets = [0, 2], sizes = [16, 1], strides = [1, 1]} : vector<16x4xf32> to vector<16x1xf32>
    %363 = vector.extract_strided_slice %7 {offsets = [0, 2], sizes = [1, 1], strides = [1, 1]} : vector<1x4xf32> to vector<1x1xf32>
    %364 = vector.broadcast %363 : vector<1x1xf32> to vector<16x1xf32>
    %365 = arith.mulf %362, %364 : vector<16x1xf32>
    %366 = vector.extract_strided_slice %353 {offsets = [0, 3], sizes = [16, 1], strides = [1, 1]} : vector<16x4xf32> to vector<16x1xf32>
    %367 = vector.extract_strided_slice %7 {offsets = [0, 3], sizes = [1, 1], strides = [1, 1]} : vector<1x4xf32> to vector<1x1xf32>
    %368 = vector.broadcast %367 : vector<1x1xf32> to vector<16x1xf32>
    %369 = arith.mulf %366, %368 : vector<16x1xf32>
    %370 = arith.addf %357, %361 : vector<16x1xf32>
    %371 = arith.addf %365, %369 : vector<16x1xf32>
    %372 = arith.addf %370, %371 : vector<16x1xf32>
    %373 = vector.broadcast %8 : vector<1x1xf32> to vector<16x1xf32>
    %374 = arith.addf %372, %373 : vector<16x1xf32>
    %c0_18 = arith.constant 0 : index
    %c0_19 = arith.constant 0 : index
    %375 = vector.load %arg1[%c0_18, %c0_19] : memref<16x1xf32, #tpu.memory_space<vmem>>, vector<16x1xf32>
    tpu.vector_store %arg1[%c0_18, %c0_19], %374 {strides = array<i32>} : memref<16x1xf32, #tpu.memory_space<vmem>>, vector<16x1xf32>,
    return
  }
}

</mosaic_0001>

<llo_original>
// kernel: _gru_forward_impl.1
$region0: #{_gru_forward_impl.1}
  #allocation0 [shape = 'u32[]', space=smem, size = 0x4, offset = 0x4, fixed_abs, tag = 'smem constant byte address 0x4 - core index']
  #allocation1 [shape = 'u32[144,128]{1,0:T(1,128)}', space=vmem, size = 0x12000, scoped, tag = 'internal scratch']
  %s0 = inlined_call_operand.vmem [shape: f32[48,12], index: 0, kind: input, shape index: {}]
  %s1 = inlined_call_operand.vmem [shape: f32[16,1], index: 1, kind: output, shape index: {}]
  %s2 = sld [smem:[#allocation0]]
  $region14: #{_gru_forward_impl.1} parent=0
    _
  %s4 = ssub.s32 1, %s2
  %s5 = scalar_select 0, %s4, %s2
  // Predicated region
  $region2: #{_gru_forward_impl.1} parent=0 // pred_check
    _
  $region3: #{_gru_forward_impl.1} parent=0 // pred_check_branch
    %7 = sbr.rel (0) target = $region5
  $region4: #{_gru_forward_impl.1} parent=0 // pred_region
    _
  $region5: #{_gru_forward_impl.1} parent=0 // pred_fallthru
    _
  %v8 = vld [vmem:[%s0] sm:$0xff]
  %v9 = vld [vmem:[%s0 + $0x8] sm:$0xff]
  %v10 = vld [vmem:[%s0 + $0x10] sm:$0xff]
  %v11 = vld [vmem:[%s0 + $0x18] sm:$0xff]
  %v12 = vld [vmem:[%s0 + $0x20] sm:$0xff]
  %v13 = vld [vmem:[%s0 + $0x28] sm:$0xff]
  %v14 = vlaneseq
  %v15 = vshrl.u32 %v14, 7
  %v16 = vsub.s32 0, %v15
  %v17 = vrot.slane %v13, %v16
  %vm18 = vcmask 97280
  %v20 = vsel %vm18, %v8, 0
  %v23 = vsel %vm18, %v9, 0
  %vm25 = vcmask 1043456
  %v27 = vsel %vm25, %v11, 0
  %29 = vmatprep.subr.mxu0 0.0
  %30 = vmatpush1.msra.mxu0 0.0
  %31 = vmatprep.subr.mxu0 0.0
  %32 = vmatpush1.msra.mxu0 0.0
  %33 = vmatprep.subr.mxu0 0.0
  %34 = vmatpush1.msra.mxu0 0.0
  %35 = vmatprep.subr.mxu0 0.0
  %36 = vmatpush1.msra.mxu0 0.0
  %37 = vmatprep.subr.mxu0 0.0
  %38 = vmatpush1.msra.mxu0 0.0
  %39 = vmatprep.subr.mxu0 0.0
  %40 = vmatpush1.msra.mxu0 0.0
  %41 = vmatprep.subr.mxu0 0.0
  %42 = vmatpush1.msra.mxu0 0.0
  %43 = vmatprep.subr.mxu0 0.0
  %44 = vmatpush1.msra.mxu0 0.0
  %45 = vmatprep.subr.mxu0 0.0
  %46 = vmatpush1.msra.mxu0 0.0
  %47 = vmatprep.subr.mxu0 0.0
  %48 = vmatpush1.msra.mxu0 0.0
  %49 = vmatprep.subr.mxu0 0.0
  %50 = vmatpush1.msra.mxu0 0.0
  %51 = vmatprep.subr.mxu0 0.0
  %52 = vmatpush1.msra.mxu0 0.0
  %53 = vmatprep.subr.mxu0 0.0
  %54 = vmatpush1.msra.mxu0 0.0
  %55 = vmatprep.subr.mxu0 0.0
  %56 = vmatpush1.msra.mxu0 0.0
  %57 = vmatprep.subr.mxu0 0.0
  %v58 = vand.u32 %v27, 4294901760
  %59 = vmatpush1.msra.mxu0 %v58
  %60 = vmatprep.subr.mxu0 0.0
  %v61 = vand.u32 %v10, 4294901760
  %62 = vmatpush1.msra.mxu0 %v61
  %63 = vmatprep.subr.mxu0 0.0
  %64 = vmatpush2.msra.mxu0 0.0
  %65 = vmatprep.subr.mxu0 0.0
  %66 = vmatpush2.msra.mxu0 0.0
  %67 = vmatprep.subr.mxu0 0.0
  %68 = vmatpush2.msra.mxu0 0.0
  %69 = vmatprep.subr.mxu0 0.0
  %70 = vmatpush2.msra.mxu0 0.0
  %71 = vmatprep.subr.mxu0 0.0
  %72 = vmatpush2.msra.mxu0 0.0
  %73 = vmatprep.subr.mxu0 0.0
  %74 = vmatpush2.msra.mxu0 0.0
  %75 = vmatprep.subr.mxu0 0.0
  %76 = vmatpush2.msra.mxu0 0.0
  %77 = vmatprep.subr.mxu0 0.0
  %78 = vmatpush2.msra.mxu0 0.0
  %79 = vmatprep.subr.mxu0 0.0
  %80 = vmatpush2.msra.mxu0 0.0
  %81 = vmatprep.subr.mxu0 0.0
  %82 = vmatpush2.msra.mxu0 0.0
  %83 = vmatprep.subr.mxu0 0.0
  %84 = vmatpush2.msra.mxu0 0.0
  %85 = vmatprep.subr.mxu0 0.0
  %86 = vmatpush2.msra.mxu0 0.0
  %87 = vmatprep.subr.mxu0 0.0
  %88 = vmatpush2.msra.mxu0 0.0
  %89 = vmatprep.subr.mxu0 0.0
  %90 = vmatpush2.msra.mxu0 0.0
  %91 = vmatprep.subr.mxu0 0.0
  %92 = vmatpush2.msra.mxu0 0.0
  %93 = vmatprep.subr.mxu0 0.0
  %94 = vmatpush2.msra.mxu0 0.0
  %95 = vmatprep.mubr.f32.mxu0 0.0
  %v96 = vand.u32 %v20, 4294901760
  %v97 = vsub.f32 %v20, %v96
  %v98 = vand.u32 %v97, 4294901760
  %v99 = vsub.f32 %v97, %v98
  %v100 = vand.u32 %v99, 4294901760
  %101 = vmatmul.mubr.f32.gmra.mxu0 %v100
  %v102 = vpop.f32.mrf.mxu0
  %v103 = vadd.f32 %v17, %v102
  %v104 = vpop.f32.mrf.mxu0
  %105 = vmatprep.mubr.f32.mxu0 0.0
  %v106 = vand.u32 %v23, 4294901760
  %v107 = vsub.f32 %v23, %v106
  %v108 = vand.u32 %v107, 4294901760
  %v109 = vsub.f32 %v107, %v108
  %v110 = vand.u32 %v109, 4294901760
  %111 = vmatmul.mubr.f32.gmra.mxu0 %v110
  %v112 = vpop.f32.mrf.mxu0
  %v113 = vadd.f32 %v17, %v112
  %v114 = vpop.f32.mrf.mxu0
  %115 = vdwg.mxu0
  %116 = vmatprep.subr.mxu0 0.0
  %117 = vmatpush1.msra.mxu0 0.0
  %118 = vmatprep.subr.mxu0 0.0
  %119 = vmatpush1.msra.mxu0 0.0
  %120 = vmatprep.subr.mxu0 0.0
  %121 = vmatpush1.msra.mxu0 0.0
  %122 = vmatprep.subr.mxu0 0.0
  %123 = vmatpush1.msra.mxu0 0.0
  %124 = vmatprep.subr.mxu0 0.0
  %125 = vmatpush1.msra.mxu0 0.0
  %126 = vmatprep.subr.mxu0 0.0
  %127 = vmatpush1.msra.mxu0 0.0
  %128 = vmatprep.subr.mxu0 0.0
  %129 = vmatpush1.msra.mxu0 0.0
  %130 = vmatprep.subr.mxu0 0.0
  %131 = vmatpush1.msra.mxu0 0.0
  %132 = vmatprep.subr.mxu0 0.0
  %133 = vmatpush1.msra.mxu0 0.0
  %134 = vmatprep.subr.mxu0 0.0
  %135 = vmatpush1.msra.mxu0 0.0
  %136 = vmatprep.subr.mxu0 0.0
  %137 = vmatpush1.msra.mxu0 0.0
  %138 = vmatprep.subr.mxu0 0.0
  %139 = vmatpush1.msra.mxu0 0.0
  %140 = vmatprep.subr.mxu0 0.0
  %141 = vmatpush1.msra.mxu0 0.0
  %142 = vmatprep.subr.mxu0 0.0
  %143 = vmatpush1.msra.mxu0 0.0
  %144 = vmatprep.subr.mxu0 0.0
  %v145 = vand.u32 %v27, 4294901760
  %v146 = vsub.f32 %v27, %v145
  %v147 = vand.u32 %v146, 4294901760
  %v148 = vsub.f32 %v146, %v147
  %v149 = vand.u32 %v148, 4294901760
  %150 = vmatpush1.msra.mxu0 %v149
  %151 = vmatprep.subr.mxu0 0.0
  %v152 = vand.u32 %v10, 4294901760
  %v153 = vsub.f32 %v10, %v152
  %v154 = vand.u32 %v153, 4294901760
  %v155 = vsub.f32 %v153, %v154
  %v156 = vand.u32 %v155, 4294901760
  %157 = vmatpush1.msra.mxu0 %v156
  %158 = vmatprep.subr.mxu0 0.0
  %159 = vmatpush2.msra.mxu0 0.0
  %160 = vmatprep.subr.mxu0 0.0
  %161 = vmatpush2.msra.mxu0 0.0
  %162 = vmatprep.subr.mxu0 0.0
  %163 = vmatpush2.msra.mxu0 0.0
  %164 = vmatprep.subr.mxu0 0.0
  %165 = vmatpush2.msra.mxu0 0.0
  %166 = vmatprep.subr.mxu0 0.0
  %167 = vmatpush2.msra.mxu0 0.0
  %168 = vmatprep.subr.mxu0 0.0
  %169 = vmatpush2.msra.mxu0 0.0
  %170 = vmatprep.subr.mxu0 0.0
  %171 = vmatpush2.msra.mxu0 0.0
  %172 = vmatprep.subr.mxu0 0.0
  %173 = vmatpush2.msra.mxu0 0.0
  %174 = vmatprep.subr.mxu0 0.0
  %175 = vmatpush2.msra.mxu0 0.0
  %176 = vmatprep.subr.mxu0 0.0
  %177 = vmatpush2.msra.mxu0 0.0
  %178 = vmatprep.subr.mxu0 0.0
  %179 = vmatpush2.msra.mxu0 0.0
  %180 = vmatprep.subr.mxu0 0.0
  %181 = vmatpush2.msra.mxu0 0.0
  %182 = vmatprep.subr.mxu0 0.0
  %183 = vmatpush2.msra.mxu0 0.0
  %184 = vmatprep.subr.mxu0 0.0
  %185 = vmatpush2.msra.mxu0 0.0
  %186 = vmatprep.subr.mxu0 0.0
  %187 = vmatpush2.msra.mxu0 0.0
  %188 = vmatprep.subr.mxu0 0.0
  %189 = vmatpush2.msra.mxu0 0.0
  %190 = vmatprep.mubr.f32.mxu0 0.0
  %v191 = vand.u32 %v20, 4294901760
  %192 = vmatmul.mubr.f32.gmra.mxu0 %v191
  %v193 = vpop.f32.mrf.mxu0
  %v194 = vadd.f32 %v103, %v193
  %v195 = vpop.f32.mrf.mxu0
  %196 = vmatprep.mubr.f32.mxu0 0.0
  %v197 = vand.u32 %v23, 4294901760
  %198 = vmatmul.mubr.f32.gmra.mxu0 %v197
  %v199 = vpop.f32.mrf.mxu0
  %v200 = vadd.f32 %v113, %v199
  %v201 = vpop.f32.mrf.mxu0
  %202 = vdwg.mxu0
  %203 = vmatprep.subr.mxu0 0.0
  %204 = vmatpush1.msra.mxu0 0.0
  %205 = vmatprep.subr.mxu0 0.0
  %206 = vmatpush1.msra.mxu0 0.0
  %207 = vmatprep.subr.mxu0 0.0
  %208 = vmatpush1.msra.mxu0 0.0
  %209 = vmatprep.subr.mxu0 0.0
  %210 = vmatpush1.msra.mxu0 0.0
  %211 = vmatprep.subr.mxu0 0.0
  %212 = vmatpush1.msra.mxu0 0.0
  %213 = vmatprep.subr.mxu0 0.0
  %214 = vmatpush1.msra.mxu0 0.0
  %215 = vmatprep.subr.mxu0 0.0
  %216 = vmatpush1.msra.mxu0 0.0
  %217 = vmatprep.subr.mxu0 0.0
  %218 = vmatpush1.msra.mxu0 0.0
  %219 = vmatprep.subr.mxu0 0.0
  %220 = vmatpush1.msra.mxu0 0.0
  %221 = vmatprep.subr.mxu0 0.0
  %222 = vmatpush1.msra.mxu0 0.0
  %223 = vmatprep.subr.mxu0 0.0
  %224 = vmatpush1.msra.mxu0 0.0
  %225 = vmatprep.subr.mxu0 0.0
  %226 = vmatpush1.msra.mxu0 0.0
  %227 = vmatprep.subr.mxu0 0.0
  %228 = vmatpush1.msra.mxu0 0.0
  %229 = vmatprep.subr.mxu0 0.0
  %230 = vmatpush1.msra.mxu0 0.0
  %231 = vmatprep.subr.mxu0 0.0
  %v232 = vand.u32 %v27, 4294901760
  %v233 = vsub.f32 %v27, %v232
  %234 = vmatpush1.msra.mxu0 %v233
  %235 = vmatprep.subr.mxu0 0.0
  %v236 = vand.u32 %v10, 4294901760
  %v237 = vsub.f32 %v10, %v236
  %238 = vmatpush1.msra.mxu0 %v237
  %239 = vmatprep.subr.mxu0 0.0
  %240 = vmatpush2.msra.mxu0 0.0
  %241 = vmatprep.subr.mxu0 0.0
  %242 = vmatpush2.msra.mxu0 0.0
  %243 = vmatprep.subr.mxu0 0.0
  %244 = vmatpush2.msra.mxu0 0.0
  %245 = vmatprep.subr.mxu0 0.0
  %246 = vmatpush2.msra.mxu0 0.0
  %247 = vmatprep.subr.mxu0 0.0
  %248 = vmatpush2.msra.mxu0 0.0
  %249 = vmatprep.subr.mxu0 0.0
  %250 = vmatpush2.msra.mxu0 0.0
  %251 = vmatprep.subr.mxu0 0.0
  %252 = vmatpush2.msra.mxu0 0.0
  %253 = vmatprep.subr.mxu0 0.0
  %254 = vmatpush2.msra.mxu0 0.0
  %255 = vmatprep.subr.mxu0 0.0
  %256 = vmatpush2.msra.mxu0 0.0
  %257 = vmatprep.subr.mxu0 0.0
  %258 = vmatpush2.msra.mxu0 0.0
  %259 = vmatprep.subr.mxu0 0.0
  %260 = vmatpush2.msra.mxu0 0.0
  %261 = vmatprep.subr.mxu0 0.0
  %262 = vmatpush2.msra.mxu0 0.0
  %263 = vmatprep.subr.mxu0 0.0
  %264 = vmatpush2.msra.mxu0 0.0
  %265 = vmatprep.subr.mxu0 0.0
  %266 = vmatpush2.msra.mxu0 0.0
  %267 = vmatprep.subr.mxu0 0.0
  %268 = vmatpush2.msra.mxu0 0.0
  %269 = vmatprep.subr.mxu0 0.0
  %270 = vmatpush2.msra.mxu0 0.0
  %271 = vmatprep.mubr.f32.mxu0 0.0
  %v272 = vand.u32 %v20, 4294901760
  %v273 = vsub.f32 %v20, %v272
  %274 = vmatmul.mubr.f32.gmra.mxu0 %v273
  %v275 = vpop.f32.mrf.mxu0
  %v276 = vadd.f32 %v194, %v275
  %v277 = vpop.f32.mrf.mxu0
  %278 = vmatprep.mubr.f32.mxu0 0.0
  %v279 = vand.u32 %v23, 4294901760
  %v280 = vsub.f32 %v23, %v279
  %281 = vmatmul.mubr.f32.gmra.mxu0 %v280
  %v282 = vpop.f32.mrf.mxu0
  %v283 = vadd.f32 %v200, %v282
  %v284 = vpop.f32.mrf.mxu0
  %285 = vdwg.mxu0
  %286 = vmatprep.subr.mxu0 0.0
  %287 = vmatpush1.msra.mxu0 0.0
  %288 = vmatprep.subr.mxu0 0.0
  %289 = vmatpush1.msra.mxu0 0.0
  %290 = vmatprep.subr.mxu0 0.0
  %291 = vmatpush1.msra.mxu0 0.0
  %292 = vmatprep.subr.mxu0 0.0
  %293 = vmatpush1.msra.mxu0 0.0
  %294 = vmatprep.subr.mxu0 0.0
  %295 = vmatpush1.msra.mxu0 0.0
  %296 = vmatprep.subr.mxu0 0.0
  %297 = vmatpush1.msra.mxu0 0.0
  %298 = vmatprep.subr.mxu0 0.0
  %299 = vmatpush1.msra.mxu0 0.0
  %300 = vmatprep.subr.mxu0 0.0
  %301 = vmatpush1.msra.mxu0 0.0
  %302 = vmatprep.subr.mxu0 0.0
  %303 = vmatpush1.msra.mxu0 0.0
  %304 = vmatprep.subr.mxu0 0.0
  %305 = vmatpush1.msra.mxu0 0.0
  %306 = vmatprep.subr.mxu0 0.0
  %307 = vmatpush1.msra.mxu0 0.0
  %308 = vmatprep.subr.mxu0 0.0
  %309 = vmatpush1.msra.mxu0 0.0
  %310 = vmatprep.subr.mxu0 0.0
  %311 = vmatpush1.msra.mxu0 0.0
  %312 = vmatprep.subr.mxu0 0.0
  %313 = vmatpush1.msra.mxu0 0.0
  %314 = vmatprep.subr.mxu0 0.0
  %v315 = vand.u32 %v27, 4294901760
  %316 = vmatpush1.msra.mxu0 %v315
  %317 = vmatprep.subr.mxu0 0.0
  %v318 = vand.u32 %v10, 4294901760
  %319 = vmatpush1.msra.mxu0 %v318
  %320 = vmatprep.subr.mxu0 0.0
  %321 = vmatpush2.msra.mxu0 0.0
  %322 = vmatprep.subr.mxu0 0.0
  %323 = vmatpush2.msra.mxu0 0.0
  %324 = vmatprep.subr.mxu0 0.0
  %325 = vmatpush2.msra.mxu0 0.0
  %326 = vmatprep.subr.mxu0 0.0
  %327 = vmatpush2.msra.mxu0 0.0
  %328 = vmatprep.subr.mxu0 0.0
  %329 = vmatpush2.msra.mxu0 0.0
  %330 = vmatprep.subr.mxu0 0.0
  %331 = vmatpush2.msra.mxu0 0.0
  %332 = vmatprep.subr.mxu0 0.0
  %333 = vmatpush2.msra.mxu0 0.0
  %334 = vmatprep.subr.mxu0 0.0
  %335 = vmatpush2.msra.mxu0 0.0
  %336 = vmatprep.subr.mxu0 0.0
  %337 = vmatpush2.msra.mxu0 0.0
  %338 = vmatprep.subr.mxu0 0.0
  %339 = vmatpush2.msra.mxu0 0.0
  %340 = vmatprep.subr.mxu0 0.0
  %341 = vmatpush2.msra.mxu0 0.0
  %342 = vmatprep.subr.mxu0 0.0
  %343 = vmatpush2.msra.mxu0 0.0
  %344 = vmatprep.subr.mxu0 0.0
  %345 = vmatpush2.msra.mxu0 0.0
  %346 = vmatprep.subr.mxu0 0.0
  %347 = vmatpush2.msra.mxu0 0.0
  %348 = vmatprep.subr.mxu0 0.0
  %349 = vmatpush2.msra.mxu0 0.0
  %350 = vmatprep.subr.mxu0 0.0
  %351 = vmatpush2.msra.mxu0 0.0
  %352 = vmatprep.mubr.f32.mxu0 0.0
  %v353 = vand.u32 %v20, 4294901760
  %v354 = vsub.f32 %v20, %v353
  %v355 = vand.u32 %v354, 4294901760
  %356 = vmatmul.mubr.f32.gmra.mxu0 %v355
  %v357 = vpop.f32.mrf.mxu0
  %v358 = vadd.f32 %v276, %v357
  %v359 = vpop.f32.mrf.mxu0
  %360 = vmatprep.mubr.f32.mxu0 0.0
  %v361 = vand.u32 %v23, 4294901760
  %v362 = vsub.f32 %v23, %v361
  %v363 = vand.u32 %v362, 4294901760
  %364 = vmatmul.mubr.f32.gmra.mxu0 %v363
  %v365 = vpop.f32.mrf.mxu0
  %v366 = vadd.f32 %v283, %v365
  %v367 = vpop.f32.mrf.mxu0
  %368 = vdwg.mxu0
  %369 = vmatprep.subr.mxu0 0.0
  %370 = vmatpush1.msra.mxu0 0.0
  %371 = vmatprep.subr.mxu0 0.0
  %372 = vmatpush1.msra.mxu0 0.0
  %373 = vmatprep.subr.mxu0 0.0
  %374 = vmatpush1.msra.mxu0 0.0
  %375 = vmatprep.subr.mxu0 0.0
  %376 = vmatpush1.msra.mxu0 0.0
  %377 = vmatprep.subr.mxu0 0.0
  %378 = vmatpush1.msra.mxu0 0.0
  %379 = vmatprep.subr.mxu0 0.0
  %380 = vmatpush1.msra.mxu0 0.0
  %381 = vmatprep.subr.mxu0 0.0
  %382 = vmatpush1.msra.mxu0 0.0
  %383 = vmatprep.subr.mxu0 0.0
  %384 = vmatpush1.msra.mxu0 0.0
  %385 = vmatprep.subr.mxu0 0.0
  %386 = vmatpush1.msra.mxu0 0.0
  %387 = vmatprep.subr.mxu0 0.0
  %388 = vmatpush1.msra.mxu0 0.0
  %389 = vmatprep.subr.mxu0 0.0
  %390 = vmatpush1.msra.mxu0 0.0
  %391 = vmatprep.subr.mxu0 0.0
  %392 = vmatpush1.msra.mxu0 0.0
  %393 = vmatprep.subr.mxu0 0.0
  %394 = vmatpush1.msra.mxu0 0.0
  %395 = vmatprep.subr.mxu0 0.0
  %396 = vmatpush1.msra.mxu0 0.0
  %397 = vmatprep.subr.mxu0 0.0
  %v398 = vand.u32 %v27, 4294901760
  %v399 = vsub.f32 %v27, %v398
  %v400 = vand.u32 %v399, 4294901760
  %401 = vmatpush1.msra.mxu0 %v400
  %402 = vmatprep.subr.mxu0 0.0
  %v403 = vand.u32 %v10, 4294901760
  %v404 = vsub.f32 %v10, %v403
  %v405 = vand.u32 %v404, 4294901760
  %406 = vmatpush1.msra.mxu0 %v405
  %407 = vmatprep.subr.mxu0 0.0
  %408 = vmatpush2.msra.mxu0 0.0
  %409 = vmatprep.subr.mxu0 0.0
  %410 = vmatpush2.msra.mxu0 0.0
  %411 = vmatprep.subr.mxu0 0.0
  %412 = vmatpush2.msra.mxu0 0.0
  %413 = vmatprep.subr.mxu0 0.0
  %414 = vmatpush2.msra.mxu0 0.0
  %415 = vmatprep.subr.mxu0 0.0
  %416 = vmatpush2.msra.mxu0 0.0
  %417 = vmatprep.subr.mxu0 0.0
  %418 = vmatpush2.msra.mxu0 0.0
  %419 = vmatprep.subr.mxu0 0.0
  %420 = vmatpush2.msra.mxu0 0.0
  %421 = vmatprep.subr.mxu0 0.0
  %422 = vmatpush2.msra.mxu0 0.0
  %423 = vmatprep.subr.mxu0 0.0
  %424 = vmatpush2.msra.mxu0 0.0
  %425 = vmatprep.subr.mxu0 0.0
  %426 = vmatpush2.msra.mxu0 0.0
  %427 = vmatprep.subr.mxu0 0.0
  %428 = vmatpush2.msra.mxu0 0.0
  %429 = vmatprep.subr.mxu0 0.0
  %430 = vmatpush2.msra.mxu0 0.0
  %431 = vmatprep.subr.mxu0 0.0
  %432 = vmatpush2.msra.mxu0 0.0
  %433 = vmatprep.subr.mxu0 0.0
  %434 = vmatpush2.msra.mxu0 0.0
  %435 = vmatprep.subr.mxu0 0.0
  %436 = vmatpush2.msra.mxu0 0.0
  %437 = vmatprep.subr.mxu0 0.0
  %438 = vmatpush2.msra.mxu0 0.0
  %439 = vmatprep.mubr.f32.mxu0 0.0
  %v440 = vand.u32 %v20, 4294901760
  %441 = vmatmul.mubr.f32.gmra.mxu0 %v440
  %v442 = vpop.f32.mrf.mxu0
  %v443 = vadd.f32 %v358, %v442
  %v444 = vpop.f32.mrf.mxu0
  %445 = vmatprep.mubr.f32.mxu0 0.0
  %v446 = vand.u32 %v23, 4294901760
  %447 = vmatmul.mubr.f32.gmra.mxu0 %v446
  %v448 = vpop.f32.mrf.mxu0
  %v449 = vadd.f32 %v366, %v448
  %v450 = vpop.f32.mrf.mxu0
  %451 = vdwg.mxu0
  %452 = vmatprep.subr.mxu0 0.0
  %453 = vmatpush1.msra.mxu0 0.0
  %454 = vmatprep.subr.mxu0 0.0
  %455 = vmatpush1.msra.mxu0 0.0
  %456 = vmatprep.subr.mxu0 0.0
  %457 = vmatpush1.msra.mxu0 0.0
  %458 = vmatprep.subr.mxu0 0.0
  %459 = vmatpush1.msra.mxu0 0.0
  %460 = vmatprep.subr.mxu0 0.0
  %461 = vmatpush1.msra.mxu0 0.0
  %462 = vmatprep.subr.mxu0 0.0
  %463 = vmatpush1.msra.mxu0 0.0
  %464 = vmatprep.subr.mxu0 0.0
  %465 = vmatpush1.msra.mxu0 0.0
  %466 = vmatprep.subr.mxu0 0.0
  %467 = vmatpush1.msra.mxu0 0.0
  %468 = vmatprep.subr.mxu0 0.0
  %469 = vmatpush1.msra.mxu0 0.0
  %470 = vmatprep.subr.mxu0 0.0
  %471 = vmatpush1.msra.mxu0 0.0
  %472 = vmatprep.subr.mxu0 0.0
  %473 = vmatpush1.msra.mxu0 0.0
  %474 = vmatprep.subr.mxu0 0.0
  %475 = vmatpush1.msra.mxu0 0.0
  %476 = vmatprep.subr.mxu0 0.0
  %477 = vmatpush1.msra.mxu0 0.0
  %478 = vmatprep.subr.mxu0 0.0
  %479 = vmatpush1.msra.mxu0 0.0
  %480 = vmatprep.subr.mxu0 0.0
  %v481 = vand.u32 %v27, 4294901760
  %482 = vmatpush1.msra.mxu0 %v481
  %483 = vmatprep.subr.mxu0 0.0
  %v484 = vand.u32 %v10, 4294901760
  %485 = vmatpush1.msra.mxu0 %v484
  %486 = vmatprep.subr.mxu0 0.0
  %487 = vmatpush2.msra.mxu0 0.0
  %488 = vmatprep.subr.mxu0 0.0
  %489 = vmatpush2.msra.mxu0 0.0
  %490 = vmatprep.subr.mxu0 0.0
  %491 = vmatpush2.msra.mxu0 0.0
  %492 = vmatprep.subr.mxu0 0.0
  %493 = vmatpush2.msra.mxu0 0.0
  %494 = vmatprep.subr.mxu0 0.0
  %495 = vmatpush2.msra.mxu0 0.0
  %496 = vmatprep.subr.mxu0 0.0
  %497 = vmatpush2.msra.mxu0 0.0
  %498 = vmatprep.subr.mxu0 0.0
  %499 = vmatpush2.msra.mxu0 0.0
  %500 = vmatprep.subr.mxu0 0.0
  %501 = vmatpush2.msra.mxu0 0.0
  %502 = vmatprep.subr.mxu0 0.0
  %503 = vmatpush2.msra.mxu0 0.0
  %504 = vmatprep.subr.mxu0 0.0
  %505 = vmatpush2.msra.mxu0 0.0
  %506 = vmatprep.subr.mxu0 0.0
  %507 = vmatpush2.msra.mxu0 0.0
  %508 = vmatprep.subr.mxu0 0.0
  %509 = vmatpush2.msra.mxu0 0.0
  %510 = vmatprep.subr.mxu0 0.0
  %511 = vmatpush2.msra.mxu0 0.0
  %512 = vmatprep.subr.mxu0 0.0
  %513 = vmatpush2.msra.mxu0 0.0
  %514 = vmatprep.subr.mxu0 0.0
  %515 = vmatpush2.msra.mxu0 0.0
  %516 = vmatprep.subr.mxu0 0.0
  %517 = vmatpush2.msra.mxu0 0.0
  %518 = vmatprep.mubr.f32.mxu0 0.0
  %v519 = vand.u32 %v20, 4294901760
  %520 = vmatmul.mubr.f32.gmra.mxu0 %v519
  %v521 = vpop.f32.mrf.mxu0
  %v522 = vadd.f32 %v443, %v521
  %v523 = vpop.f32.mrf.mxu0
  %524 = vmatprep.mubr.f32.mxu0 0.0
  %v525 = vand.u32 %v23, 4294901760
  %526 = vmatmul.mubr.f32.gmra.mxu0 %v525
  %v527 = vpop.f32.mrf.mxu0
  %v528 = vadd.f32 %v449, %v527
  %v529 = vpop.f32.mrf.mxu0
  %530 = vdwg.mxu0
  %v531 = vlaneseq
  %v532 = vshrl.u32 %v531, 7
  %v533 = vsub.s32 0, %v532
  %v534 = vrot.slane %v12, %v533
  %v535 = vmul.f32 %v534, 0.0
  %v536 = vlaneseq
  %v537 = vshrl.u32 %v536, 7
  %v538 = vsub.s32 1, %v537
  %v539 = vrot.slane %v12, %v538
  %v540 = vmul.f32 %v539, 0.0
  %v541 = vlaneseq
  %v542 = vshrl.u32 %v541, 7
  %v543 = vsub.s32 2, %v542
  %v544 = vrot.slane %v12, %v543
  %v545 = vmul.f32 %v544, 0.0
  %v546 = vlaneseq
  %v547 = vshrl.u32 %v546, 7
  %v548 = vsub.s32 3, %v547
  %v549 = vrot.slane %v12, %v548
  %v550 = vmul.f32 %v549, 0.0
  %v551 = vadd.f32 %v535, %v540
  %v552 = vadd.f32 %v545, %v550
  %v553 = vadd.f32 %v551, %v552
  %v554 = vadd.f32 %v522, %v553
  %v555 = vxor.u32 %v554, 2147483648
  %v556 = vmul.f32 %v555, 1.442695
  %v557 = vpow.pop %v556
  %v558 = vadd.f32 %v557, 1.0
  %v559 = vrcp.pop %v558
  %v560 = vmul.f32 1.0, %v559
  %v561 = vlaneseq
  %v562 = vshrl.u32 %v561, 7
  %v563 = vsub.s32 1, %v562
  %v564 = vrot.slane %v13, %v563
  %566 = vrot.lane.b32.xlu0 %v564, 8
  %v567 = vpop.permute.xlu0 %566
  %v569 = vadd.f32 %v553, %v567
  %571 = vrot.lane.b32.xlu0 %v569, 120
  %v572 = vpop.permute.xlu0 %571
  %v574 = vmul.f32 %v560, %v572
  %576 = vrot.lane.b32.xlu0 %v574, 8
  %v577 = vpop.permute.xlu0 %576
  %v579 = vadd.f32 %v522, %v577
  %v580 = vtanh.pop %v579
  %v581 = vsub.f32 1.0, %v560
  %583 = vrot.lane.b32.xlu0 %v580, 124
  %v584 = vpop.permute.xlu0 %583
  %v586 = vmul.f32 %v581, %v584
  %v587 = vmul.f32 %v560, 0.0
  %v588 = vadd.f32 %v586, %v587
  %590 = vset.pattern.permute.xlu0 4
  %591 = vperm.xlu0 %590, %v588
  %v592 = vpop.permute.xlu0 %591
  %v594 = vmul.f32 %v592, %v534
  %595 = vset.pattern.permute.xlu0 5
  %596 = vperm.xlu0 %595, %v588
  %v597 = vpop.permute.xlu0 %596
  %v599 = vmul.f32 %v597, %v539
  %600 = vset.pattern.permute.xlu0 6
  %601 = vperm.xlu0 %600, %v588
  %v602 = vpop.permute.xlu0 %601
  %v604 = vmul.f32 %v602, %v544
  %605 = vset.pattern.permute.xlu0 7
  %606 = vperm.xlu0 %605, %v588
  %v607 = vpop.permute.xlu0 %606
  %v609 = vmul.f32 %v607, %v549
  %v610 = vadd.f32 %v594, %v599
  %v611 = vadd.f32 %v604, %v609
  %v612 = vadd.f32 %v610, %v611
  %v614 = vrot.slane %v612, 6
  %v616 = vadd.f32 %v522, %v614
  %v617 = vxor.u32 %v616, 2147483648
  %v618 = vmul.f32 %v617, 1.442695
  %v619 = vpow.pop %v618
  %v620 = vadd.f32 %v619, 1.0
  %v621 = vrcp.pop %v620
  %v622 = vmul.f32 1.0, %v621
  %v623 = vadd.f32 %v612, %v567
  %v625 = vrot.slane %v623, 6
  %626 = vrot.lane.b32.xlu0 %v625, 120
  %v627 = vpop.permute.xlu0 %626
  %v629 = vmul.f32 %v622, %v627
  %631 = vrot.lane.b32.xlu0 %v629, 8
  %v632 = vpop.permute.xlu0 %631
  %v634 = vadd.f32 %v522, %v632
  %v635 = vtanh.pop %v634
  %v636 = vsub.f32 1.0, %v622
  %638 = vrot.lane.b32.xlu0 %v635, 124
  %v639 = vpop.permute.xlu0 %638
  %v641 = vmul.f32 %v636, %v639
  %v642 = vrot.slane %v588, 6
  %v644 = vmul.f32 %v622, %v642
  %v645 = vadd.f32 %v641, %v644
  %647 = vset.pattern.permute.xlu0 4
  %648 = vperm.xlu0 %647, %v645
  %v649 = vpop.permute.xlu0 %648
  %v651 = vmul.f32 %v649, %v534
  %652 = vset.pattern.permute.xlu0 5
  %653 = vperm.xlu0 %652, %v645
  %v654 = vpop.permute.xlu0 %653
  %v656 = vmul.f32 %v654, %v539
  %657 = vset.pattern.permute.xlu0 6
  %658 = vperm.xlu0 %657, %v645
  %v659 = vpop.permute.xlu0 %658
  %v661 = vmul.f32 %v659, %v544
  %662 = vset.pattern.permute.xlu0 7
  %663 = vperm.xlu0 %662, %v645
  %v664 = vpop.permute.xlu0 %663
  %v666 = vmul.f32 %v664, %v549
  %v667 = vadd.f32 %v651, %v656
  %v668 = vadd.f32 %v661, %v666
  %v669 = vadd.f32 %v667, %v668
  %v671 = vrot.slane %v669, 6
  %v673 = vadd.f32 %v522, %v671
  %v674 = vxor.u32 %v673, 2147483648
  %v675 = vmul.f32 %v674, 1.442695
  %v676 = vpow.pop %v675
  %v677 = vadd.f32 %v676, 1.0
  %v678 = vrcp.pop %v677
  %v679 = vmul.f32 1.0, %v678
  %v680 = vadd.f32 %v669, %v567
  %v682 = vrot.slane %v680, 6
  %683 = vrot.lane.b32.xlu0 %v682, 120
  %v684 = vpop.permute.xlu0 %683
  %v686 = vmul.f32 %v679, %v684
  %688 = vrot.lane.b32.xlu0 %v686, 8
  %v689 = vpop.permute.xlu0 %688
  %v691 = vadd.f32 %v522, %v689
  %v692 = vtanh.pop %v691
  %v693 = vsub.f32 1.0, %v679
  %695 = vrot.lane.b32.xlu0 %v692, 124
  %v696 = vpop.permute.xlu0 %695
  %v698 = vmul.f32 %v693, %v696
  %v699 = vrot.slane %v645, 6
  %v701 = vmul.f32 %v679, %v699
  %v702 = vadd.f32 %v698, %v701
  %704 = vset.pattern.permute.xlu0 4
  %705 = vperm.xlu0 %704, %v702
  %v706 = vpop.permute.xlu0 %705
  %v708 = vmul.f32 %v706, %v534
  %709 = vset.pattern.permute.xlu0 5
  %710 = vperm.xlu0 %709, %v702
  %v711 = vpop.permute.xlu0 %710
  %v713 = vmul.f32 %v711, %v539
  %714 = vset.pattern.permute.xlu0 6
  %715 = vperm.xlu0 %714, %v702
  %v716 = vpop.permute.xlu0 %715
  %v718 = vmul.f32 %v716, %v544
  %719 = vset.pattern.permute.xlu0 7
  %720 = vperm.xlu0 %719, %v702
  %v721 = vpop.permute.xlu0 %720
  %v723 = vmul.f32 %v721, %v549
  %v724 = vadd.f32 %v708, %v713
  %v725 = vadd.f32 %v718, %v723
  %v726 = vadd.f32 %v724, %v725
  %v728 = vrot.slane %v726, 6
  %v730 = vadd.f32 %v522, %v728
  %v731 = vxor.u32 %v730, 2147483648
  %v732 = vmul.f32 %v731, 1.442695
  %v733 = vpow.pop %v732
  %v734 = vadd.f32 %v733, 1.0
  %v735 = vrcp.pop %v734
  %v736 = vmul.f32 1.0, %v735
  %v737 = vadd.f32 %v726, %v567
  %v739 = vrot.slane %v737, 6
  %740 = vrot.lane.b32.xlu0 %v739, 120
  %v741 = vpop.permute.xlu0 %740
  %v743 = vmul.f32 %v736, %v741
  %745 = vrot.lane.b32.xlu0 %v743, 8
  %v746 = vpop.permute.xlu0 %745
  %v748 = vadd.f32 %v522, %v746
  %v749 = vtanh.pop %v748
  %v750 = vsub.f32 1.0, %v736
  %752 = vrot.lane.b32.xlu0 %v749, 124
  %v753 = vpop.permute.xlu0 %752
  %v755 = vmul.f32 %v750, %v753
  %v756 = vrot.slane %v702, 6
  %v758 = vmul.f32 %v736, %v756
  %v759 = vadd.f32 %v755, %v758
  %761 = vset.pattern.permute.xlu0 4
  %762 = vperm.xlu0 %761, %v759
  %v763 = vpop.permute.xlu0 %762
  %v765 = vmul.f32 %v763, %v534
  %766 = vset.pattern.permute.xlu0 5
  %767 = vperm.xlu0 %766, %v759
  %v768 = vpop.permute.xlu0 %767
  %v770 = vmul.f32 %v768, %v539
  %771 = vset.pattern.permute.xlu0 6
  %772 = vperm.xlu0 %771, %v759
  %v773 = vpop.permute.xlu0 %772
  %v775 = vmul.f32 %v773, %v544
  %776 = vset.pattern.permute.xlu0 7
  %777 = vperm.xlu0 %776, %v759
  %v778 = vpop.permute.xlu0 %777
  %v780 = vmul.f32 %v778, %v549
  %v781 = vadd.f32 %v765, %v770
  %v782 = vadd.f32 %v775, %v780
  %v783 = vadd.f32 %v781, %v782
  %v785 = vrot.slane %v783, 6
  %v787 = vadd.f32 %v528, %v785
  %v788 = vxor.u32 %v787, 2147483648
  %v789 = vmul.f32 %v788, 1.442695
  %v790 = vpow.pop %v789
  %v791 = vadd.f32 %v790, 1.0
  %v792 = vrcp.pop %v791
  %v793 = vmul.f32 1.0, %v792
  %v794 = vadd.f32 %v783, %v567
  %v796 = vrot.slane %v794, 6
  %797 = vrot.lane.b32.xlu0 %v796, 120
  %v798 = vpop.permute.xlu0 %797
  %v800 = vmul.f32 %v793, %v798
  %802 = vrot.lane.b32.xlu0 %v800, 8
  %v803 = vpop.permute.xlu0 %802
  %v805 = vadd.f32 %v528, %v803
  %v806 = vtanh.pop %v805
  %v807 = vsub.f32 1.0, %v793
  %809 = vrot.lane.b32.xlu0 %v806, 124
  %v810 = vpop.permute.xlu0 %809
  %v812 = vmul.f32 %v807, %v810
  %v813 = vrot.slane %v759, 6
  %v815 = vmul.f32 %v793, %v813
  %v816 = vadd.f32 %v812, %v815
  %818 = vset.pattern.permute.xlu0 4
  %819 = vperm.xlu0 %818, %v816
  %v820 = vpop.permute.xlu0 %819
  %v822 = vmul.f32 %v820, %v534
  %823 = vset.pattern.permute.xlu0 5
  %824 = vperm.xlu0 %823, %v816
  %v825 = vpop.permute.xlu0 %824
  %v827 = vmul.f32 %v825, %v539
  %828 = vset.pattern.permute.xlu0 6
  %829 = vperm.xlu0 %828, %v816
  %v830 = vpop.permute.xlu0 %829
  %v832 = vmul.f32 %v830, %v544
  %833 = vset.pattern.permute.xlu0 7
  %834 = vperm.xlu0 %833, %v816
  %v835 = vpop.permute.xlu0 %834
  %v837 = vmul.f32 %v835, %v549
  %v838 = vadd.f32 %v822, %v827
  %v839 = vadd.f32 %v832, %v837
  %v840 = vadd.f32 %v838, %v839
  %v842 = vrot.slane %v840, 6
  %v844 = vadd.f32 %v528, %v842
  %v845 = vxor.u32 %v844, 2147483648
  %v846 = vmul.f32 %v845, 1.442695
  %v847 = vpow.pop %v846
  %v848 = vadd.f32 %v847, 1.0
  %v849 = vrcp.pop %v848
  %v850 = vmul.f32 1.0, %v849
  %v851 = vadd.f32 %v840, %v567
  %v853 = vrot.slane %v851, 6
  %854 = vrot.lane.b32.xlu0 %v853, 120
  %v855 = vpop.permute.xlu0 %854
  %v857 = vmul.f32 %v850, %v855
  %859 = vrot.lane.b32.xlu0 %v857, 8
  %v860 = vpop.permute.xlu0 %859
  %v862 = vadd.f32 %v528, %v860
  %v863 = vtanh.pop %v862
  %v864 = vsub.f32 1.0, %v850
  %866 = vrot.lane.b32.xlu0 %v863, 124
  %v867 = vpop.permute.xlu0 %866
  %v869 = vmul.f32 %v864, %v867
  %v870 = vrot.slane %v816, 6
  %v872 = vmul.f32 %v850, %v870
  %v873 = vadd.f32 %v869, %v872
  %875 = vset.pattern.permute.xlu0 4
  %876 = vperm.xlu0 %875, %v873
  %v877 = vpop.permute.xlu0 %876
  %v879 = vmul.f32 %v877, %v534
  %880 = vset.pattern.permute.xlu0 5
  %881 = vperm.xlu0 %880, %v873
  %v882 = vpop.permute.xlu0 %881
  %v884 = vmul.f32 %v882, %v539
  %885 = vset.pattern.permute.xlu0 6
  %886 = vperm.xlu0 %885, %v873
  %v887 = vpop.permute.xlu0 %886
  %v889 = vmul.f32 %v887, %v544
  %890 = vset.pattern.permute.xlu0 7
  %891 = vperm.xlu0 %890, %v873
  %v892 = vpop.permute.xlu0 %891
  %v894 = vmul.f32 %v892, %v549
  %v895 = vadd.f32 %v879, %v884
  %v896 = vadd.f32 %v889, %v894
  %v897 = vadd.f32 %v895, %v896
  %v899 = vrot.slane %v897, 6
  %v901 = vadd.f32 %v528, %v899
  %v902 = vxor.u32 %v901, 2147483648
  %v903 = vmul.f32 %v902, 1.442695
  %v904 = vpow.pop %v903
  %v905 = vadd.f32 %v904, 1.0
  %v906 = vrcp.pop %v905
  %v907 = vmul.f32 1.0, %v906
  %v908 = vadd.f32 %v897, %v567
  %v910 = vrot.slane %v908, 6
  %911 = vrot.lane.b32.xlu0 %v910, 120
  %v912 = vpop.permute.xlu0 %911
  %v914 = vmul.f32 %v907, %v912
  %916 = vrot.lane.b32.xlu0 %v914, 8
  %v917 = vpop.permute.xlu0 %916
  %v919 = vadd.f32 %v528, %v917
  %v920 = vtanh.pop %v919
  %v921 = vsub.f32 1.0, %v907
  %923 = vrot.lane.b32.xlu0 %v920, 124
  %v924 = vpop.permute.xlu0 %923
  %v926 = vmul.f32 %v921, %v924
  %v927 = vrot.slane %v873, 6
  %v929 = vmul.f32 %v907, %v927
  %v930 = vadd.f32 %v926, %v929
  %932 = vset.pattern.permute.xlu0 4
  %933 = vperm.xlu0 %932, %v930
  %v934 = vpop.permute.xlu0 %933
  %v936 = vmul.f32 %v934, %v534
  %937 = vset.pattern.permute.xlu0 5
  %938 = vperm.xlu0 %937, %v930
  %v939 = vpop.permute.xlu0 %938
  %v941 = vmul.f32 %v939, %v539
  %942 = vset.pattern.permute.xlu0 6
  %943 = vperm.xlu0 %942, %v930
  %v944 = vpop.permute.xlu0 %943
  %v946 = vmul.f32 %v944, %v544
  %947 = vset.pattern.permute.xlu0 7
  %948 = vperm.xlu0 %947, %v930
  %v949 = vpop.permute.xlu0 %948
  %v951 = vmul.f32 %v949, %v549
  %v952 = vadd.f32 %v936, %v941
  %v953 = vadd.f32 %v946, %v951
  %v954 = vadd.f32 %v952, %v953
  %v956 = vrot.slane %v954, 6
  %v958 = vadd.f32 %v528, %v956
  %v959 = vxor.u32 %v958, 2147483648
  %v960 = vmul.f32 %v959, 1.442695
  %v961 = vpow.pop %v960
  %v962 = vadd.f32 %v961, 1.0
  %v963 = vrcp.pop %v962
  %v964 = vmul.f32 1.0, %v963
  %v965 = vadd.f32 %v954, %v567
  %v967 = vrot.slane %v965, 6
  %968 = vrot.lane.b32.xlu0 %v967, 120
  %v969 = vpop.permute.xlu0 %968
  %v971 = vmul.f32 %v964, %v969
  %973 = vrot.lane.b32.xlu0 %v971, 8
  %v974 = vpop.permute.xlu0 %973
  %v976 = vadd.f32 %v528, %v974
  %v977 = vtanh.pop %v976
  %v978 = vsub.f32 1.0, %v964
  %980 = vrot.lane.b32.xlu0 %v977, 124
  %v981 = vpop.permute.xlu0 %980
  %v983 = vmul.f32 %v978, %v981
  %v984 = vrot.slane %v930, 6
  %v986 = vmul.f32 %v964, %v984
  %v987 = vadd.f32 %v983, %v986
  %vm988 = vcmask 1041408
  %v989 = vsel %vm988, %v588, %v645
  %v990 = vsel %vm25, %v989, %v702
  %vm991 = vcmask 1045504
  %v992 = vsel %vm991, %v990, %v759
  %v993 = vsel %vm988, %v816, %v873
  %v994 = vsel %vm25, %v993, %v930
  %v995 = vsel %vm991, %v994, %v987
  %v996 = vmul.f32 %v992, %v564
  %v997 = vmul.f32 %v995, %v564
  %1000 = vrot.lane.b32.xlu0 %v996, 127
  %v1001 = vpop.permute.xlu0 %1000
  %1002 = vrot.lane.b32.xlu0 %v997, 127
  %v1003 = vpop.permute.xlu0 %1002
  %v1006 = vadd.f32 %v996, %v1001
  %v1007 = vadd.f32 %v997, %v1003
  %1010 = vrot.lane.b32.xlu0 %v1006, 126
  %v1011 = vpop.permute.xlu0 %1010
  %1012 = vrot.lane.b32.xlu0 %v1007, 126
  %v1013 = vpop.permute.xlu0 %1012
  %v1016 = vadd.f32 %v1006, %v1011
  %v1017 = vadd.f32 %v1007, %v1013
  %1018 = vrot.lane.b32.xlu0 %v564, 124
  %v1019 = vpop.permute.xlu0 %1018
  %v1021 = vadd.f32 %v1016, %v1019
  %v1022 = vadd.f32 %v1017, %v1019
  %1025 = vrot.lane.b32.xlu0 %v1021, 124
  %v1026 = vpop.permute.xlu0 %1025
  %1027 = vrot.lane.b32.xlu0 %v1022, 124
  %v1028 = vpop.permute.xlu0 %1027
  %vm1031 = vcmask 7168
  %1032 = vst.msk [vmem:[%s1] sm:$0xff] %vm1031, %v1026
  %1033 = vst.msk [vmem:[%s1 + $0x8] sm:$0xff] %vm1031, %v1028
  // Predicated region
  $region6: #{_gru_forward_impl.1} parent=0 // pred_check
    _
  $region7: #{_gru_forward_impl.1} parent=0 // pred_check_branch
    %1035 = sbr.rel (0) target = $region9
  $region8: #{_gru_forward_impl.1} parent=0 // pred_region
    _
  $region9: #{_gru_forward_impl.1} parent=0 // pred_fallthru
    _
  // Predicated region
  $region10: #{_gru_forward_impl.1} parent=0 // pred_check
    _
  $region11: #{_gru_forward_impl.1} parent=0 // pred_check_branch
    %1037 = sbr.rel (0) target = $region13
  $region12: #{_gru_forward_impl.1} parent=0 // pred_region
    _
  $region13: #{_gru_forward_impl.1} parent=0 // pred_fallthru
    _

</llo_original>
